<compile_context>
chip_gen: v7x
topology: tpu7x:2x2x1
jax: 0.10.0
libtpu: 0.0.40
codegen_flags: <defaults>
</compile_context>

<pallas_src>
import functools

import jax
import jax.numpy as jnp
import numpy as np
from jax import lax
from jax.experimental import pallas as pl
from jax.experimental.pallas import tpu as pltpu


def _round_up(x, m):
    return (x + m - 1) // m * m


def _pick_tile_cin():
    """256-deep contraction chunks on v6e/v7x (256x256 MXU), 128 elsewhere."""
    try:
        kind = jax.devices()[0].device_kind.lower()
    except Exception:
        kind = ""
    return 256 if ("v6" in kind or "v7" in kind) else 128


def _hint8(v):
    return v if isinstance(v, int) else pl.multiple_of(v, 8)


def _conv_t_kernel(x_ref, w_ref, acc_ref, *, G, GS, TILE_CIN, W_al, H_acc, RPC, NKP):
    # x_ref  : (1, H_pad*W_al, TILE_CIN) bf16  flattened padded input, one Cin chunk
    # w_ref  : (G, Cin_pad, NKP)         bf16  packed weight, fully VMEM-resident
    # acc_ref: (1, H_acc*W_al, NKP)      f32   lane-dense accumulator == kernel output
    c = pl.program_id(1)

    @pl.when(c == 0)
    def _init():
        acc_ref[...] = jnp.zeros_like(acc_ref)

    cin0 = pl.multiple_of(c * TILE_CIN, TILE_CIN)   # row offset into resident weight

    def do_chunk(row0, n_rows):
        # GEMM over this Cin chunk for `n_rows` pseudo output rows.  Each tap
        # group g uses a free sublane offset of g*GS rows on the flattened
        # input (W_al % 16 == 0 keeps every bf16 slice start tile-aligned);
        # the G partial results are summed in vregs and written back with a
        # single contiguous RMW on the flattened accumulator.
        m = n_rows * W_al
        a0 = _hint8(row0 * W_al)
        local = None
        for g in range(G):
            xoff = _hint8(a0 + g * GS * W_al)
            xs = x_ref[0, pl.ds(xoff, m), :]                       # (m, TILE_CIN) bf16
            wg = w_ref[g, pl.ds(cin0, TILE_CIN), :]                # (TILE_CIN, NKP) bf16
            part = jnp.dot(xs, wg, preferred_element_type=jnp.float32)
            local = part if local is None else local + part
        acc_ref[0, pl.ds(a0, m), :] += local

    n_full = H_acc // RPC
    tail = H_acc - n_full * RPC
    if n_full > 0:
        def body(i, carry):
            do_chunk(i * RPC, RPC)
            return carry
        lax.fori_loop(0, n_full, body, 0)
    if tail > 0:
        do_chunk(n_full * RPC, tail)


@functools.partial(jax.jit, static_argnames=("padding",))
def conv_transpose2d_silu(x_nchw, w_t, bias, *, padding):
    """x_nchw: (B, Cin, H, W) f32; w_t: PyTorch ConvTranspose2d weight (Cin, Cout, K, K)."""
    B, Cin, H, W = x_nchw.shape
    Cout, K = w_t.shape[1], w_t.shape[2]
    eff = K - 1 - padding
    assert eff >= 0

    GS = 3 if K % 3 == 0 else (2 if K % 2 == 0 else 1)   # kh taps packed per lane group
    G = K // GS
    NK = K * Cout                      # 72 lanes per kh tap
    NKL = GS * NK                      # 216 real lanes per group
    NKP = _round_up(NKL, 128)          # 256: lane-dense, unmasked stores
    TILE_CIN = _pick_tile_cin()

    H_pad, W_pad = H + 2 * eff, W + 2 * eff
    H_out, W_out = H_pad - K + 1, W_pad - K + 1
    H_acc = H_out + GS - 1             # extra rows hold the d=1..GS-1 shifted taps
    W_al = _round_up(W_pad, 16)        # 16: bf16 packed-sublane alignment
    Cin_pad = _round_up(Cin, TILE_CIN)
    n_cin = Cin_pad // TILE_CIN

    # --- input: NHWC bf16, single fused pad (spatial + W align + Cin pad), flatten ---
    x = jnp.transpose(x_nchw, (0, 2, 3, 1)).astype(jnp.bfloat16)
    x = jnp.pad(x, ((0, 0), (eff, eff), (eff, eff + (W_al - W_pad)), (0, Cin_pad - Cin)))
    x_flat = x.reshape(B, H_pad * W_al, Cin_pad)

    # --- packed weight: w2[g, ci, d*NK + kw*Cout + co] = w_t[ci, co, K-1-(g*GS+d), K-1-kw] ---
    wf = w_t[:, :, ::-1, ::-1]                                     # flipped (Cin, Cout, K, K)
    w2 = jnp.transpose(wf, (2, 0, 3, 1)).reshape(K, Cin, NK)       # (kh, ci, kw*Cout+co)
    w2 = jnp.transpose(w2.reshape(G, GS, Cin, NK), (0, 2, 1, 3)).reshape(G, Cin, NKL)
    w2 = jnp.pad(w2, ((0, 0), (0, Cin_pad - Cin), (0, NKP - NKL))).astype(jnp.bfloat16)

    # Rows per chunk: keep the vreg-resident partial sum <= ~24 vregs (m <= 96).
    RPC = max(1, min(H_acc, 96 // W_al))

    kernel = functools.partial(
        _conv_t_kernel, G=G, GS=GS, TILE_CIN=TILE_CIN,
        W_al=W_al, H_acc=H_acc, RPC=RPC, NKP=NKP)

    acc = pl.pallas_call(
        kernel,
        out_shape=jax.ShapeDtypeStruct((B, H_acc * W_al, NKP), jnp.float32),
        grid_spec=pltpu.PrefetchScalarGridSpec(
            num_scalar_prefetch=0,
            grid=(B, n_cin),
            in_specs=[
                pl.BlockSpec((1, H_pad * W_al, TILE_CIN), lambda b, c: (b, 0, c)),
                pl.BlockSpec((G, Cin_pad, NKP), lambda b, c: (0, 0, 0)),   # resident weight
            ],
            out_specs=pl.BlockSpec((1, H_acc * W_al, NKP), lambda b, c: (b, 0, 0)),
        ),
        compiler_params=pltpu.CompilerParams(
            dimension_semantics=("parallel", "arbitrary"),
            vmem_limit_bytes=48 * 1024 * 1024,
        ),
    )(x_flat, w2)

    # --- epilogue in XLA: col2im (row shift over d, kw shift), bias, SiLU, NCHW ---
    acc4 = acc.reshape(B, H_acc, W_al, NKP)
    res1 = acc4[:, 0:H_out, :, 0:NK]
    for d in range(1, GS):
        res1 = res1 + acc4[:, d:d + H_out, :, d * NK:(d + 1) * NK]
    out = res1[:, :, 0:W_out, 0:Cout]
    for kw in range(1, K):
        out = out + res1[:, :, kw:kw + W_out, kw * Cout:(kw + 1) * Cout]
    out = out + bias.reshape(1, 1, 1, Cout).astype(jnp.float32)
    out = out * jax.nn.sigmoid(out)                                # SiLU: v * sigmoid(v)
    return jnp.transpose(out, (0, 3, 1, 2))                        # NCHW like the module


def _reference(x_nchw, w_t, bias, *, padding):
    """Transposed conv + SiLU with the kernel's bf16 operand quantization (f32 accumulate)."""
    K = w_t.shape[2]
    eff = K - 1 - padding
    xq = x_nchw.astype(jnp.bfloat16).astype(jnp.float32)
    wq = w_t.astype(jnp.bfloat16).astype(jnp.float32)
    wf = jnp.transpose(wq[:, :, ::-1, ::-1], (1, 0, 2, 3))         # (Cout, Cin, K, K)
    v = lax.conv_general_dilated(
        xq, wf, window_strides=(1, 1),
        padding=[(eff, eff), (eff, eff)],
        dimension_numbers=("NCHW", "OIHW", "NCHW"),
        precision=lax.Precision.HIGHEST)
    v = v + bias.reshape(1, -1, 1, 1)
    return v * jax.nn.sigmoid(v)


if __name__ == "__main__":
    # Small shapes consistent with the module's forward (original: Cin=1613, 72x72):
    # keep kernel_size=12, stride=1, padding=6 so output spatial == H - 1.
    # Cin=384 exercises the Cin zero-padding and (on 128-chunk chips) the
    # multi-chunk reduction path; B=2 exercises the "parallel" batch axis and
    # the resident-weight BlockSpec.
    B, Cin, H, W = 2, 384, 16, 16
    Cout, K, PAD = 6, 12, 6

    key = jax.random.PRNGKey(0)
    kx, kwt, kb = jax.random.split(key, 3)
    x = jax.random.normal(kx, (B, Cin, H, W), dtype=jnp.float32)

    fan_in = Cin * K * K
    bound = 1.0 / float(np.sqrt(fan_in))
    w_t = jax.random.uniform(kwt, (Cin, Cout, K, K), jnp.float32, -bound, bound)
    bias = jax.random.uniform(kb, (Cout,), jnp.float32, -bound, bound)

    out = conv_transpose2d_silu(x, w_t, bias, padding=PAD)
    out = jax.block_until_ready(out)

    assert out.shape == (B, Cout, H - 1, W - 1), out.shape
    ref = _reference(x, w_t, bias, padding=PAD)
    np.testing.assert_allclose(np.asarray(out), np.asarray(ref),
                               rtol=1e-3, atol=1e-3)
    print("KERNEL_OK")
</pallas_src>

<mosaic_0001>
module attributes {stable_mosaic.version = 11 : i64} {
  func.func @_conv_t_kernel(%arg0: i32, %arg1: i32, %arg2: memref<1x832x128xbf16, #tpu.memory_space<vmem>>, %arg3: memref<4x384x256xbf16, #tpu.memory_space<vmem>>, %arg4: memref<1x544x256xf32, #tpu.memory_space<vmem>>) attributes {dimension_semantics = [#tpu.dimension_semantics<parallel>, #tpu.dimension_semantics<arbitrary>], iteration_bounds = array<i64: 2, 3>, scalar_prefetch = 0 : i64, scratch_operands = 0 : i64, tpu.core_type = #tpu.core_type<tc>, window_params = [{transform_indices = @transform_0, window_bounds = array<i64: 1, 832, 128>}, {pipeline_mode = #tpu.pipeline_mode<synchronous>, transform_indices = @transform_1, window_bounds = array<i64: 4, 384, 256>}, {transform_indices = @transform_2, window_bounds = array<i64: 1, 544, 256>}]} {
    %c0_i32 = arith.constant 0 : i32
    %0 = arith.cmpi eq, %arg1, %c0_i32 : i32
    %1 = arith.extui %0 : i1 to i32
    %c0_i32_0 = arith.constant 0 : i32
    %2 = arith.cmpi ne, %1, %c0_i32_0 : i32
    scf.if %2 {
      %cst_24 = arith.constant 0.000000e+00 : f32
      %39 = vector.broadcast %cst_24 : f32 to vector<1x544x256xf32>
      %c0_25 = arith.constant 0 : index
      %c0_26 = arith.constant 0 : index
      %c0_27 = arith.constant 0 : index
      %40 = vector.load %arg4[%c0_25, %c0_26, %c0_27] : memref<1x544x256xf32, #tpu.memory_space<vmem>>, vector<1x544x256xf32>
      tpu.vector_store %arg4[%c0_25, %c0_26, %c0_27], %39 {strides = array<i32>} : memref<1x544x256xf32, #tpu.memory_space<vmem>>, vector<1x544x256xf32>,
    } else {
    }
    %c128_i32 = arith.constant 128 : i32
    %3 = arith.muli %arg1, %c128_i32 : i32
    %4 = tpu.assume_multiple %3, 128 : i32
    %c0_i32_1 = arith.constant 0 : i32
    %c5_i32 = arith.constant 5 : i32
    %5 = arith.addi %c0_i32_1, %c5_i32 : i32
    %c1_i32 = arith.constant 1 : i32
    scf.for %arg5 = %c0_i32_1 to %5 step %c1_i32  : i32 {
      %c3_i32 = arith.constant 3 : i32
      %39 = arith.muli %arg5, %c3_i32 : i32
      %c32_i32 = arith.constant 32 : i32
      %40 = arith.muli %39, %c32_i32 : i32
      %41 = tpu.assume_multiple %40, 8 : i32
      %c0_i32_24 = arith.constant 0 : i32
      %42 = arith.addi %41, %c0_i32_24 : i32
      %43 = tpu.assume_multiple %42, 8 : i32
      %c0_25 = arith.constant 0 : index
      %44 = arith.index_cast %43 : i32 to index
      %c0_26 = arith.constant 0 : index
      %45 = vector.load %arg2[%c0_25, %44, %c0_26] : memref<1x832x128xbf16, #tpu.memory_space<vmem>>, vector<1x96x128xbf16>
      %46 = vector.shape_cast %45 : vector<1x96x128xbf16> to vector<96x128xbf16>
      %c0_27 = arith.constant 0 : index
      %47 = arith.index_cast %4 : i32 to index
      %c0_28 = arith.constant 0 : index
      %48 = vector.load %arg3[%c0_27, %47, %c0_28] : memref<4x384x256xbf16, #tpu.memory_space<vmem>>, vector<1x128x256xbf16>
      %49 = vector.shape_cast %48 : vector<1x128x256xbf16> to vector<128x256xbf16>
      %cst_29 = arith.constant dense<0.000000e+00> : vector<96x256xf32>
      %50 = tpu.matmul %46, %49, %cst_29 {dimension_numbers = #tpu.dot_dimension_numbers<[1], [0], [0], [1], [0, 0, 1, 1], [], []>} : vector<96x128xbf16>, vector<128x256xbf16>, vector<96x256xf32> -> vector<96x256xf32>
      %c96_i32 = arith.constant 96 : i32
      %51 = arith.addi %41, %c96_i32 : i32
      %52 = tpu.assume_multiple %51, 8 : i32
      %c0_30 = arith.constant 0 : index
      %53 = arith.index_cast %52 : i32 to index
      %c0_31 = arith.constant 0 : index
      %54 = vector.load %arg2[%c0_30, %53, %c0_31] : memref<1x832x128xbf16, #tpu.memory_space<vmem>>, vector<1x96x128xbf16>
      %55 = vector.shape_cast %54 : vector<1x96x128xbf16> to vector<96x128xbf16>
      %c1_32 = arith.constant 1 : index
      %56 = arith.index_cast %4 : i32 to index
      %c0_33 = arith.constant 0 : index
      %57 = vector.load %arg3[%c1_32, %56, %c0_33] : memref<4x384x256xbf16, #tpu.memory_space<vmem>>, vector<1x128x256xbf16>
      %58 = vector.shape_cast %57 : vector<1x128x256xbf16> to vector<128x256xbf16>
      %cst_34 = arith.constant dense<0.000000e+00> : vector<96x256xf32>
      %59 = tpu.matmul %55, %58, %cst_34 {dimension_numbers = #tpu.dot_dimension_numbers<[1], [0], [0], [1], [0, 0, 1, 1], [], []>} : vector<96x128xbf16>, vector<128x256xbf16>, vector<96x256xf32> -> vector<96x256xf32>
      %60 = arith.addf %50, %59 : vector<96x256xf32>
      %c192_i32 = arith.constant 192 : i32
      %61 = arith.addi %41, %c192_i32 : i32
      %62 = tpu.assume_multiple %61, 8 : i32
      %c0_35 = arith.constant 0 : index
      %63 = arith.index_cast %62 : i32 to index
      %c0_36 = arith.constant 0 : index
      %64 = vector.load %arg2[%c0_35, %63, %c0_36] : memref<1x832x128xbf16, #tpu.memory_space<vmem>>, vector<1x96x128xbf16>
      %65 = vector.shape_cast %64 : vector<1x96x128xbf16> to vector<96x128xbf16>
      %c2_37 = arith.constant 2 : index
      %66 = arith.index_cast %4 : i32 to index
      %c0_38 = arith.constant 0 : index
      %67 = vector.load %arg3[%c2_37, %66, %c0_38] : memref<4x384x256xbf16, #tpu.memory_space<vmem>>, vector<1x128x256xbf16>
      %68 = vector.shape_cast %67 : vector<1x128x256xbf16> to vector<128x256xbf16>
      %cst_39 = arith.constant dense<0.000000e+00> : vector<96x256xf32>
      %69 = tpu.matmul %65, %68, %cst_39 {dimension_numbers = #tpu.dot_dimension_numbers<[1], [0], [0], [1], [0, 0, 1, 1], [], []>} : vector<96x128xbf16>, vector<128x256xbf16>, vector<96x256xf32> -> vector<96x256xf32>
      %70 = arith.addf %60, %69 : vector<96x256xf32>
      %c288_i32 = arith.constant 288 : i32
      %71 = arith.addi %41, %c288_i32 : i32
      %72 = tpu.assume_multiple %71, 8 : i32
      %c0_40 = arith.constant 0 : index
      %73 = arith.index_cast %72 : i32 to index
      %c0_41 = arith.constant 0 : index
      %74 = vector.load %arg2[%c0_40, %73, %c0_41] : memref<1x832x128xbf16, #tpu.memory_space<vmem>>, vector<1x96x128xbf16>
      %75 = vector.shape_cast %74 : vector<1x96x128xbf16> to vector<96x128xbf16>
      %c3_42 = arith.constant 3 : index
      %76 = arith.index_cast %4 : i32 to index
      %c0_43 = arith.constant 0 : index
      %77 = vector.load %arg3[%c3_42, %76, %c0_43] : memref<4x384x256xbf16, #tpu.memory_space<vmem>>, vector<1x128x256xbf16>
      %78 = vector.shape_cast %77 : vector<1x128x256xbf16> to vector<128x256xbf16>
      %cst_44 = arith.constant dense<0.000000e+00> : vector<96x256xf32>
      %79 = tpu.matmul %75, %78, %cst_44 {dimension_numbers = #tpu.dot_dimension_numbers<[1], [0], [0], [1], [0, 0, 1, 1], [], []>} : vector<96x128xbf16>, vector<128x256xbf16>, vector<96x256xf32> -> vector<96x256xf32>
      %80 = arith.addf %70, %79 : vector<96x256xf32>
      %c0_45 = arith.constant 0 : index
      %81 = arith.index_cast %41 : i32 to index
      %c0_46 = arith.constant 0 : index
      %82 = vector.load %arg4[%c0_45, %81, %c0_46] : memref<1x544x256xf32, #tpu.memory_space<vmem>>, vector<1x96x256xf32>
      %83 = vector.shape_cast %82 : vector<1x96x256xf32> to vector<96x256xf32>
      %84 = arith.addf %83, %80 : vector<96x256xf32>
      %c0_47 = arith.constant 0 : index
      %85 = arith.index_cast %41 : i32 to index
      %c0_48 = arith.constant 0 : index
      %86 = vector.load %arg4[%c0_47, %85, %c0_48] : memref<1x544x256xf32, #tpu.memory_space<vmem>>, vector<1x96x256xf32>
      %87 = vector.shape_cast %86 : vector<1x96x256xf32> to vector<96x256xf32>
      %88 = vector.shape_cast %84 : vector<96x256xf32> to vector<1x96x256xf32>
      tpu.vector_store %arg4[%c0_47, %85, %c0_48], %88 {strides = array<i32>} : memref<1x544x256xf32, #tpu.memory_space<vmem>>, vector<1x96x256xf32>,
    }
    %c5_i32_2 = arith.constant 5 : i32
    %c0 = arith.constant 0 : index
    %c480 = arith.constant 480 : index
    %c0_3 = arith.constant 0 : index
    %6 = vector.load %arg2[%c0, %c480, %c0_3] : memref<1x832x128xbf16, #tpu.memory_space<vmem>>, vector<1x64x128xbf16>
    %7 = vector.shape_cast %6 : vector<1x64x128xbf16> to vector<64x128xbf16>
    %c0_4 = arith.constant 0 : index
    %8 = arith.index_cast %4 : i32 to index
    %c0_5 = arith.constant 0 : index
    %9 = vector.load %arg3[%c0_4, %8, %c0_5] : memref<4x384x256xbf16, #tpu.memory_space<vmem>>, vector<1x128x256xbf16>
    %10 = vector.shape_cast %9 : vector<1x128x256xbf16> to vector<128x256xbf16>
    %cst = arith.constant dense<0.000000e+00> : vector<64x256xf32>
    %11 = tpu.matmul %7, %10, %cst {dimension_numbers = #tpu.dot_dimension_numbers<[1], [0], [0], [1], [0, 0, 1, 1], [], []>} : vector<64x128xbf16>, vector<128x256xbf16>, vector<64x256xf32> -> vector<64x256xf32>
    %c0_6 = arith.constant 0 : index
    %c576 = arith.constant 576 : index
    %c0_7 = arith.constant 0 : index
    %12 = vector.load %arg2[%c0_6, %c576, %c0_7] : memref<1x832x128xbf16, #tpu.memory_space<vmem>>, vector<1x64x128xbf16>
    %13 = vector.shape_cast %12 : vector<1x64x128xbf16> to vector<64x128xbf16>
    %c1 = arith.constant 1 : index
    %14 = arith.index_cast %4 : i32 to index
    %c0_8 = arith.constant 0 : index
    %15 = vector.load %arg3[%c1, %14, %c0_8] : memref<4x384x256xbf16, #tpu.memory_space<vmem>>, vector<1x128x256xbf16>
    %16 = vector.shape_cast %15 : vector<1x128x256xbf16> to vector<128x256xbf16>
    %cst_9 = arith.constant dense<0.000000e+00> : vector<64x256xf32>
    %17 = tpu.matmul %13, %16, %cst_9 {dimension_numbers = #tpu.dot_dimension_numbers<[1], [0], [0], [1], [0, 0, 1, 1], [], []>} : vector<64x128xbf16>, vector<128x256xbf16>, vector<64x256xf32> -> vector<64x256xf32>
    %18 = arith.addf %11, %17 : vector<64x256xf32>
    %c0_10 = arith.constant 0 : index
    %c672 = arith.constant 672 : index
    %c0_11 = arith.constant 0 : index
    %19 = vector.load %arg2[%c0_10, %c672, %c0_11] : memref<1x832x128xbf16, #tpu.memory_space<vmem>>, vector<1x64x128xbf16>
    %20 = vector.shape_cast %19 : vector<1x64x128xbf16> to vector<64x128xbf16>
    %c2 = arith.constant 2 : index
    %21 = arith.index_cast %4 : i32 to index
    %c0_12 = arith.constant 0 : index
    %22 = vector.load %arg3[%c2, %21, %c0_12] : memref<4x384x256xbf16, #tpu.memory_space<vmem>>, vector<1x128x256xbf16>
    %23 = vector.shape_cast %22 : vector<1x128x256xbf16> to vector<128x256xbf16>
    %cst_13 = arith.constant dense<0.000000e+00> : vector<64x256xf32>
    %24 = tpu.matmul %20, %23, %cst_13 {dimension_numbers = #tpu.dot_dimension_numbers<[1], [0], [0], [1], [0, 0, 1, 1], [], []>} : vector<64x128xbf16>, vector<128x256xbf16>, vector<64x256xf32> -> vector<64x256xf32>
    %25 = arith.addf %18, %24 : vector<64x256xf32>
    %c0_14 = arith.constant 0 : index
    %c768 = arith.constant 768 : index
    %c0_15 = arith.constant 0 : index
    %26 = vector.load %arg2[%c0_14, %c768, %c0_15] : memref<1x832x128xbf16, #tpu.memory_space<vmem>>, vector<1x64x128xbf16>
    %27 = vector.shape_cast %26 : vector<1x64x128xbf16> to vector<64x128xbf16>
    %c3 = arith.constant 3 : index
    %28 = arith.index_cast %4 : i32 to index
    %c0_16 = arith.constant 0 : index
    %29 = vector.load %arg3[%c3, %28, %c0_16] : memref<4x384x256xbf16, #tpu.memory_space<vmem>>, vector<1x128x256xbf16>
    %30 = vector.shape_cast %29 : vector<1x128x256xbf16> to vector<128x256xbf16>
    %cst_17 = arith.constant dense<0.000000e+00> : vector<64x256xf32>
    %31 = tpu.matmul %27, %30, %cst_17 {dimension_numbers = #tpu.dot_dimension_numbers<[1], [0], [0], [1], [0, 0, 1, 1], [], []>} : vector<64x128xbf16>, vector<128x256xbf16>, vector<64x256xf32> -> vector<64x256xf32>
    %32 = arith.addf %25, %31 : vector<64x256xf32>
    %c0_18 = arith.constant 0 : index
    %c480_19 = arith.constant 480 : index
    %c0_20 = arith.constant 0 : index
    %33 = vector.load %arg4[%c0_18, %c480_19, %c0_20] : memref<1x544x256xf32, #tpu.memory_space<vmem>>, vector<1x64x256xf32>
    %34 = vector.shape_cast %33 : vector<1x64x256xf32> to vector<64x256xf32>
    %35 = arith.addf %34, %32 : vector<64x256xf32>
    %c0_21 = arith.constant 0 : index
    %c480_22 = arith.constant 480 : index
    %c0_23 = arith.constant 0 : index
    %36 = vector.load %arg4[%c0_21, %c480_22, %c0_23] : memref<1x544x256xf32, #tpu.memory_space<vmem>>, vector<1x64x256xf32>
    %37 = vector.shape_cast %36 : vector<1x64x256xf32> to vector<64x256xf32>
    %38 = vector.shape_cast %35 : vector<64x256xf32> to vector<1x64x256xf32>
    tpu.vector_store %arg4[%c0_21, %c480_22, %c0_23], %38 {strides = array<i32>} : memref<1x544x256xf32, #tpu.memory_space<vmem>>, vector<1x64x256xf32>,
    return
  }
  func.func @transform_0(%arg0: i32, %arg1: i32) -> (i32, i32, i32) {
    %c0_i32 = arith.constant 0 : i32
    %c0_i32_0 = arith.constant 0 : i32
    return %arg0, %c0_i32, %arg1 : i32, i32, i32
  }
  func.func @transform_1(%arg0: i32, %arg1: i32) -> (i32, i32, i32) {
    %c0_i32 = arith.constant 0 : i32
    %c0_i32_0 = arith.constant 0 : i32
    %c0_i32_1 = arith.constant 0 : i32
    %c0_i32_2 = arith.constant 0 : i32
    return %c0_i32, %c0_i32_0, %c0_i32_1 : i32, i32, i32
  }
  func.func @transform_2(%arg0: i32, %arg1: i32) -> (i32, i32, i32) {
    %c0_i32 = arith.constant 0 : i32
    %c0_i32_0 = arith.constant 0 : i32
    %c0_i32_1 = arith.constant 0 : i32
    return %arg0, %c0_i32, %c0_i32_0 : i32, i32, i32
  }
}

</mosaic_0001>

<llo_original>
// kernel: conv_transpose2d_silu.1
$region0: #{conv_transpose2d_silu.1}
  #allocation0 [shape = 'u32[]', space=smem, size = 0x4, offset = 0x4, fixed_abs, tag = 'smem constant byte address 0x4 - core index']
  #allocation1 [shape = 'u32[144,128]{1,0:T(1,128)}', space=vmem, size = 0x12000, scoped, tag = 'internal scratch']
  %s0 = inlined_call_operand.vmem [shape: bf16[2,832,384], index: 0, kind: input, shape index: {}]
  %s1 = inlined_call_operand.vmem [shape: bf16[4,384,256], index: 1, kind: input, shape index: {}]
  %s2 = inlined_call_operand.vmem [shape: f32[2,544,256], index: 2, kind: output, shape index: {}]
  %s3 = sld [smem:[#allocation0]]
  $region93: #{conv_transpose2d_silu.1} parent=0
    _
  %s5 = ssub.s32 1, %s3
  %s6 = scalar_select 0, %s5, %s3
  $region1: #{conv_transpose2d_silu.1} parent=0
    #allocation2 [shape = 'u8[425984]{0}', space=vmem, size = 0x68000, scoped, tag = 'input window, operand 0']
    loop: start=0, step=1, limit=8
    $region2: #{conv_transpose2d_silu.1} parent=1 // loop_pre_header
      _
    $region3: #{conv_transpose2d_silu.1} parent=1 // loop_header
      %s8 = sphi 0, %s12
      %p9 = scmp.ge.s32.totalorder %s8, 8
      %s15 = sphi 0, %s27
      %s16 = sphi 0, %s23
      %s17 = sphi 0, %s15
      %s18 = sphi 0, %s16
      %s19 = sphi 0, %s17
      %s20 = sphi 0, %s18
      %s32 = sphi 0, %s34
      %s35 = sphi 0, %s32
      %s36 = sphi 0, %s35
      %s52 = sphi 0, %s36
      %s56 = sphi 0, %s56
      %s58 = sphi 0, %s56
      %s59 = sphi 0, %s58
      %s73 = sphi 0, %s59
      %s79 = sphi 0, %s81
      %s82 = sphi 0, %s79
      %s83 = sphi 0, %s82
      %s99 = sphi 0, %s83
    $region4: #{conv_transpose2d_silu.1} parent=1 // loop_header_branch
      %11 = sbr.rel (%p9) target = $region8
    $region5: #{conv_transpose2d_silu.1} parent=1 // loop_body
      %s13 = ssub.s32 %s8, 1
      %s14 = ssub.s32 %s8, 2
      %s21 = sadd.s32 1, %s16
      %p22 = scmp.ge.s32.totalorder %s21, 3
      %s23 = scalar_select %p22, 0, %s21
      %s24 = sadd.s32 1, %s15
      %s25 = scalar_select %p22, %s24, %s15
      %p26 = scmp.ge.s32.totalorder %s25, 2
      %s27 = scalar_select %p26, 0, %s25
      %s28 = ssub.s32 %s15, %s27
      %s29 = ssub.s32 %s16, %s23
      %s30 = sor.u32 %s28, %s29
      %p31 = scmp.eq.s32.totalorder %s30, 0
      %s33 = sadd.s32 %s32, 1
      %s34 = scalar_select %p31, %s32, %s33
      %p37 = pneg %p31
      %p38 = scmp.eq.s32.totalorder %s8, 5
      %p39 = por %p37, %p38
      %p40 = scmp.ne.s32.totalorder %s32, %s35
      %p41 = scmp.eq.s32.totalorder %s8, 0
      %p42 = por %p40, %p41
      %p43 = scmp.ne.s32.totalorder %s32, %s35
      %p44 = scmp.eq.s32.totalorder %s13, 5
      %p45 = por %p43, %p44
      %p46 = scmp.ne.s32.totalorder %s35, %s36
      %p47 = scmp.eq.s32.totalorder %s13, 0
      %p48 = por %p46, %p47
      %p49 = scmp.ne.s32.totalorder %s35, %s36
      %p50 = scmp.eq.s32.totalorder %s14, 5
      %p51 = por %p49, %p50
      %p53 = scmp.ne.s32.totalorder %s36, %s52
      %p54 = scmp.eq.s32.totalorder %s14, 0
      %p55 = por %p53, %p54
      %s57 = sadd.s32 %s56, 1
      %p60 = scmp.eq.s32.totalorder %s8, 5
      %p61 = scmp.ne.s32.totalorder %s56, %s58
      %p62 = scmp.eq.s32.totalorder %s8, 0
      %p63 = por %p61, %p62
      %p64 = scmp.ne.s32.totalorder %s56, %s58
      %p65 = scmp.eq.s32.totalorder %s13, 5
      %p66 = por %p64, %p65
      %p67 = scmp.ne.s32.totalorder %s58, %s59
      %p68 = scmp.eq.s32.totalorder %s13, 0
      %p69 = por %p67, %p68
      %p70 = scmp.ne.s32.totalorder %s58, %s59
      %p71 = scmp.eq.s32.totalorder %s14, 5
      %p72 = por %p70, %p71
      %p74 = scmp.ne.s32.totalorder %s59, %s73
      %p75 = scmp.eq.s32.totalorder %s14, 0
      %p76 = por %p74, %p75
      %s77 = ssub.s32 %s15, %s27
      %p78 = scmp.eq.s32.totalorder %s77, 0
      %s80 = sadd.s32 %s79, 1
      %s81 = scalar_select %p78, %s79, %s80
      %p84 = pneg %p78
      %p85 = scmp.eq.s32.totalorder %s8, 5
      %p86 = por %p84, %p85
      %p87 = scmp.ne.s32.totalorder %s79, %s82
      %p88 = scmp.eq.s32.totalorder %s8, 0
      %p89 = por %p87, %p88
      %p90 = scmp.ne.s32.totalorder %s79, %s82
      %p91 = scmp.eq.s32.totalorder %s13, 5
      %p92 = por %p90, %p91
      %p93 = scmp.ne.s32.totalorder %s82, %s83
      %p94 = scmp.eq.s32.totalorder %s13, 0
      %p95 = por %p93, %p94
      %p96 = scmp.ne.s32.totalorder %s82, %s83
      %p97 = scmp.eq.s32.totalorder %s14, 5
      %p98 = por %p96, %p97
      %p100 = scmp.ne.s32.totalorder %s83, %s99
      %p101 = scmp.eq.s32.totalorder %s14, 0
      %p102 = por %p100, %p101
      %p103 = scmp.le.s32.totalorder 1, %s8
      %p104 = scmp.lt.s32.totalorder %s8, 7
      %p105 = pnand %p103, %p104
      %p106 = pneg %p105
      // Predicated region
      $region9: #{conv_transpose2d_silu.1} parent=5 // pred_check
        _
      $region10: #{conv_transpose2d_silu.1} parent=5 // pred_check_branch
        %108 = sbr.rel (%p105) target = $region12
      $region11: #{conv_transpose2d_silu.1} parent=5 // pred_region
        %s109 = ssub.s32 %s8, 1
        // Predicated region
        $region13: #{conv_transpose2d_silu.1} parent=11 // pred_check
          %p110 = pneg %p69
        $region14: #{conv_transpose2d_silu.1} parent=11 // pred_check_branch
          %112 = sbr.rel (%p110) target = $region16
        $region15: #{conv_transpose2d_silu.1} parent=11 // pred_region
          _
        $region16: #{conv_transpose2d_silu.1} parent=11 // pred_fallthru
          _
      $region12: #{conv_transpose2d_silu.1} parent=5 // pred_fallthru
        _
      %p113 = scmp.lt.s32.totalorder %s8, 6
      // Predicated region
      $region17: #{conv_transpose2d_silu.1} parent=5 // pred_check
        %p114 = pneg %p113
      $region18: #{conv_transpose2d_silu.1} parent=5 // pred_check_branch
        %116 = sbr.rel (%p114) target = $region20
      $region19: #{conv_transpose2d_silu.1} parent=5 // pred_region
        // Predicated region
        $region21: #{conv_transpose2d_silu.1} parent=19 // pred_check
          %p117 = pneg %p42
        $region22: #{conv_transpose2d_silu.1} parent=19 // pred_check_branch
          %119 = sbr.rel (%p117) target = $region24
        $region23: #{conv_transpose2d_silu.1} parent=19 // pred_region
          %s120 = sand.u32 %s32, 1
          %s121 = sand.u32 %s32, 1
          %s122 = smul.addr %s121, 416
          %s123 = scalar_lea.vmem [#allocation2], %s122
          %s124 = smul.addr %s15, 312
          %s125 = sadd.s32 %s16, %s124
          %s126 = smul.addr %s125, 4
          %s127 = scalar_lea.vmem %s0, %s126
          // Predicated region
          $region25: #{conv_transpose2d_silu.1} parent=23 // pred_check
            _
          $region26: #{conv_transpose2d_silu.1} parent=23 // pred_check_branch
            %129 = sbr.rel (0) target = $region28
          $region27: #{conv_transpose2d_silu.1} parent=23 // pred_region
            // Predicated region
            $region29: #{conv_transpose2d_silu.1} parent=27 // pred_check
              _
            $region30: #{conv_transpose2d_silu.1} parent=27 // pred_check_branch
              %131 = sbr.rel target = $region32
            $region31: #{conv_transpose2d_silu.1} parent=27 // pred_region
              // Predicated region
              $region44: #{conv_transpose2d_silu.1} parent=31 // pred_check
                _
              $region45: #{conv_transpose2d_silu.1} parent=31 // pred_check_branch
                %352 = sbr.rel (0) target = $region47
              $region46: #{conv_transpose2d_silu.1} parent=31 // pred_region
                loop: start=0, step=1, limit=1
                $region48: #{conv_transpose2d_silu.1} parent=46 // loop_pre_header
                  _
                $region49: #{conv_transpose2d_silu.1} parent=46 // loop_header
                  %s354 = sphi 0, %s358
                  %p355 = scmp.ge.s32.totalorder %s354, 1
                  %s359 = sphi %s127, %s127
                  %s360 = sphi %s123, %s123
                $region50: #{conv_transpose2d_silu.1} parent=46 // loop_header_branch
                  %357 = sbr.rel (%p355) target = $region54
                $region51: #{conv_transpose2d_silu.1} parent=46 // loop_body
                  _
                $region52: #{conv_transpose2d_silu.1} parent=46 // loop_footer
                  %s358 = sadd.s32 1, %s354
                $region53: #{conv_transpose2d_silu.1} parent=46 // loop_footer_branch
                  %353 = sbr.rel target = $region49
                $region54: #{conv_transpose2d_silu.1} parent=46 // loop_exit
                  _
                loop: start=0, step=1, limit=1
                $region55: #{conv_transpose2d_silu.1} parent=46 // loop_pre_header
                  _
                $region56: #{conv_transpose2d_silu.1} parent=46 // loop_header
                  %s363 = sphi 0, %s367
                  %p364 = scmp.ge.s32.totalorder %s363, 1
                  %s368 = sphi %s127, %s127
                  %s369 = sphi %s123, %s123
                $region57: #{conv_transpose2d_silu.1} parent=46 // loop_header_branch
                  %366 = sbr.rel (%p364) target = $region61
                $region58: #{conv_transpose2d_silu.1} parent=46 // loop_body
                  %v370 = vld [vmem:[%s368] sm:$0xf]
                  %371 = vst [vmem:[%s369] sm:$0xf] %v370
                  %v372 = vld [vmem:[%s368 + $0xc] sm:$0xf]
                  %373 = vst [vmem:[%s369 + $0x4] sm:$0xf] %v372
                  %v374 = vld [vmem:[%s368 + $0x18] sm:$0xf]
                  %375 = vst [vmem:[%s369 + $0x8] sm:$0xf] %v374
                  %v376 = vld [vmem:[%s368 + $0x24] sm:$0xf]
                  %377 = vst [vmem:[%s369 + $0xc] sm:$0xf] %v376
                  %v378 = vld [vmem:[%s368 + $0x30] sm:$0xf]
                  %379 = vst [vmem:[%s369 + $0x10] sm:$0xf] %v378
                  %v380 = vld [vmem:[%s368 + $0x3c] sm:$0xf]
                  %381 = vst [vmem:[%s369 + $0x14] sm:$0xf] %v380
                  %v382 = vld [vmem:[%s368 + $0x48] sm:$0xf]
                  %383 = vst [vmem:[%s369 + $0x18] sm:$0xf] %v382
                  %v384 = vld [vmem:[%s368 + $0x54] sm:$0xf]
                  %385 = vst [vmem:[%s369 + $0x1c] sm:$0xf] %v384
                  %v386 = vld [vmem:[%s368 + $0x60] sm:$0xf]
                  %387 = vst [vmem:[%s369 + $0x20] sm:$0xf] %v386
                  %v388 = vld [vmem:[%s368 + $0x6c] sm:$0xf]
                  %389 = vst [vmem:[%s369 + $0x24] sm:$0xf] %v388
                  %v390 = vld [vmem:[%s368 + $0x78] sm:$0xf]
                  %391 = vst [vmem:[%s369 + $0x28] sm:$0xf] %v390
                  %v392 = vld [vmem:[%s368 + $0x84] sm:$0xf]
                  %393 = vst [vmem:[%s369 + $0x2c] sm:$0xf] %v392
                  %v394 = vld [vmem:[%s368 + $0x90] sm:$0xf]
                  %395 = vst [vmem:[%s369 + $0x30] sm:$0xf] %v394
                  %v396 = vld [vmem:[%s368 + $0x9c] sm:$0xf]
                  %397 = vst [vmem:[%s369 + $0x34] sm:$0xf] %v396
                  %v398 = vld [vmem:[%s368 + $0xa8] sm:$0xf]
                  %399 = vst [vmem:[%s369 + $0x38] sm:$0xf] %v398
                  %v400 = vld [vmem:[%s368 + $0xb4] sm:$0xf]
                  %401 = vst [vmem:[%s369 + $0x3c] sm:$0xf] %v400
                  %v402 = vld [vmem:[%s368 + $0xc0] sm:$0xf]
                  %403 = vst [vmem:[%s369 + $0x40] sm:$0xf] %v402
                  %v404 = vld [vmem:[%s368 + $0xcc] sm:$0xf]
                  %405 = vst [vmem:[%s369 + $0x44] sm:$0xf] %v404
                  %v406 = vld [vmem:[%s368 + $0xd8] sm:$0xf]
                  %407 = vst [vmem:[%s369 + $0x48] sm:$0xf] %v406
                  %v408 = vld [vmem:[%s368 + $0xe4] sm:$0xf]
                  %409 = vst [vmem:[%s369 + $0x4c] sm:$0xf] %v408
                  %v410 = vld [vmem:[%s368 + $0xf0] sm:$0xf]
                  %411 = vst [vmem:[%s369 + $0x50] sm:$0xf] %v410
                  %v412 = vld [vmem:[%s368 + $0xfc] sm:$0xf]
                  %413 = vst [vmem:[%s369 + $0x54] sm:$0xf] %v412
                  %v414 = vld [vmem:[%s368 + $0x108] sm:$0xf]
                  %415 = vst [vmem:[%s369 + $0x58] sm:$0xf] %v414
                  %v416 = vld [vmem:[%s368 + $0x114] sm:$0xf]
                  %417 = vst [vmem:[%s369 + $0x5c] sm:$0xf] %v416
                  %v418 = vld [vmem:[%s368 + $0x120] sm:$0xf]
                  %419 = vst [vmem:[%s369 + $0x60] sm:$0xf] %v418
                  %v420 = vld [vmem:[%s368 + $0x12c] sm:$0xf]
                  %421 = vst [vmem:[%s369 + $0x64] sm:$0xf] %v420
                  %v422 = vld [vmem:[%s368 + $0x138] sm:$0xf]
                  %423 = vst [vmem:[%s369 + $0x68] sm:$0xf] %v422
                  %v424 = vld [vmem:[%s368 + $0x144] sm:$0xf]
                  %425 = vst [vmem:[%s369 + $0x6c] sm:$0xf] %v424
                  %v426 = vld [vmem:[%s368 + $0x150] sm:$0xf]
                  %427 = vst [vmem:[%s369 + $0x70] sm:$0xf] %v426
                  %v428 = vld [vmem:[%s368 + $0x15c] sm:$0xf]
                  %429 = vst [vmem:[%s369 + $0x74] sm:$0xf] %v428
                  %v430 = vld [vmem:[%s368 + $0x168] sm:$0xf]
                  %431 = vst [vmem:[%s369 + $0x78] sm:$0xf] %v430
                  %v432 = vld [vmem:[%s368 + $0x174] sm:$0xf]
                  %433 = vst [vmem:[%s369 + $0x7c] sm:$0xf] %v432
                  %v434 = vld [vmem:[%s368 + $0x180] sm:$0xf]
                  %435 = vst [vmem:[%s369 + $0x80] sm:$0xf] %v434
                  %v436 = vld [vmem:[%s368 + $0x18c] sm:$0xf]
                  %437 = vst [vmem:[%s369 + $0x84] sm:$0xf] %v436
                  %v438 = vld [vmem:[%s368 + $0x198] sm:$0xf]
                  %439 = vst [vmem:[%s369 + $0x88] sm:$0xf] %v438
                  %v440 = vld [vmem:[%s368 + $0x1a4] sm:$0xf]
                  %441 = vst [vmem:[%s369 + $0x8c] sm:$0xf] %v440
                  %v442 = vld [vmem:[%s368 + $0x1b0] sm:$0xf]
                  %443 = vst [vmem:[%s369 + $0x90] sm:$0xf] %v442
                  %v444 = vld [vmem:[%s368 + $0x1bc] sm:$0xf]
                  %445 = vst [vmem:[%s369 + $0x94] sm:$0xf] %v444
                  %v446 = vld [vmem:[%s368 + $0x1c8] sm:$0xf]
                  %447 = vst [vmem:[%s369 + $0x98] sm:$0xf] %v446
                  %v448 = vld [vmem:[%s368 + $0x1d4] sm:$0xf]
                  %449 = vst [vmem:[%s369 + $0x9c] sm:$0xf] %v448
                  %v450 = vld [vmem:[%s368 + $0x1e0] sm:$0xf]
                  %451 = vst [vmem:[%s369 + $0xa0] sm:$0xf] %v450
                  %v452 = vld [vmem:[%s368 + $0x1ec] sm:$0xf]
                  %453 = vst [vmem:[%s369 + $0xa4] sm:$0xf] %v452
                  %v454 = vld [vmem:[%s368 + $0x1f8] sm:$0xf]
                  %455 = vst [vmem:[%s369 + $0xa8] sm:$0xf] %v454
                  %v456 = vld [vmem:[%s368 + $0x204] sm:$0xf]
                  %457 = vst [vmem:[%s369 + $0xac] sm:$0xf] %v456
                  %v458 = vld [vmem:[%s368 + $0x210] sm:$0xf]
                  %459 = vst [vmem:[%s369 + $0xb0] sm:$0xf] %v458
                  %v460 = vld [vmem:[%s368 + $0x21c] sm:$0xf]
                  %461 = vst [vmem:[%s369 + $0xb4] sm:$0xf] %v460
                  %v462 = vld [vmem:[%s368 + $0x228] sm:$0xf]
                  %463 = vst [vmem:[%s369 + $0xb8] sm:$0xf] %v462
                  %v464 = vld [vmem:[%s368 + $0x234] sm:$0xf]
                  %465 = vst [vmem:[%s369 + $0xbc] sm:$0xf] %v464
                  %v466 = vld [vmem:[%s368 + $0x240] sm:$0xf]
                  %467 = vst [vmem:[%s369 + $0xc0] sm:$0xf] %v466
                  %v468 = vld [vmem:[%s368 + $0x24c] sm:$0xf]
                  %469 = vst [vmem:[%s369 + $0xc4] sm:$0xf] %v468
                  %v470 = vld [vmem:[%s368 + $0x258] sm:$0xf]
                  %471 = vst [vmem:[%s369 + $0xc8] sm:$0xf] %v470
                  %v472 = vld [vmem:[%s368 + $0x264] sm:$0xf]
                  %473 = vst [vmem:[%s369 + $0xcc] sm:$0xf] %v472
                  %v474 = vld [vmem:[%s368 + $0x270] sm:$0xf]
                  %475 = vst [vmem:[%s369 + $0xd0] sm:$0xf] %v474
                  %v476 = vld [vmem:[%s368 + $0x27c] sm:$0xf]
                  %477 = vst [vmem:[%s369 + $0xd4] sm:$0xf] %v476
                  %v478 = vld [vmem:[%s368 + $0x288] sm:$0xf]
                  %479 = vst [vmem:[%s369 + $0xd8] sm:$0xf] %v478
                  %v480 = vld [vmem:[%s368 + $0x294] sm:$0xf]
                  %481 = vst [vmem:[%s369 + $0xdc] sm:$0xf] %v480
                  %v482 = vld [vmem:[%s368 + $0x2a0] sm:$0xf]
                  %483 = vst [vmem:[%s369 + $0xe0] sm:$0xf] %v482
                  %v484 = vld [vmem:[%s368 + $0x2ac] sm:$0xf]
                  %485 = vst [vmem:[%s369 + $0xe4] sm:$0xf] %v484
                  %v486 = vld [vmem:[%s368 + $0x2b8] sm:$0xf]
                  %487 = vst [vmem:[%s369 + $0xe8] sm:$0xf] %v486
                  %v488 = vld [vmem:[%s368 + $0x2c4] sm:$0xf]
                  %489 = vst [vmem:[%s369 + $0xec] sm:$0xf] %v488
                  %v490 = vld [vmem:[%s368 + $0x2d0] sm:$0xf]
                  %491 = vst [vmem:[%s369 + $0xf0] sm:$0xf] %v490
                  %v492 = vld [vmem:[%s368 + $0x2dc] sm:$0xf]
                  %493 = vst [vmem:[%s369 + $0xf4] sm:$0xf] %v492
                  %v494 = vld [vmem:[%s368 + $0x2e8] sm:$0xf]
                  %495 = vst [vmem:[%s369 + $0xf8] sm:$0xf] %v494
                  %v496 = vld [vmem:[%s368 + $0x2f4] sm:$0xf]
                  %497 = vst [vmem:[%s369 + $0xfc] sm:$0xf] %v496
                  %v498 = vld [vmem:[%s368 + $0x300] sm:$0xf]
                  %499 = vst [vmem:[%s369 + $0x100] sm:$0xf] %v498
                  %v500 = vld [vmem:[%s368 + $0x30c] sm:$0xf]
                  %501 = vst [vmem:[%s369 + $0x104] sm:$0xf] %v500
                  %v502 = vld [vmem:[%s368 + $0x318] sm:$0xf]
                  %503 = vst [vmem:[%s369 + $0x108] sm:$0xf] %v502
                  %v504 = vld [vmem:[%s368 + $0x324] sm:$0xf]
                  %505 = vst [vmem:[%s369 + $0x10c] sm:$0xf] %v504
                  %v506 = vld [vmem:[%s368 + $0x330] sm:$0xf]
                  %507 = vst [vmem:[%s369 + $0x110] sm:$0xf] %v506
                  %v508 = vld [vmem:[%s368 + $0x33c] sm:$0xf]
                  %509 = vst [vmem:[%s369 + $0x114] sm:$0xf] %v508
                  %v510 = vld [vmem:[%s368 + $0x348] sm:$0xf]
                  %511 = vst [vmem:[%s369 + $0x118] sm:$0xf] %v510
                  %v512 = vld [vmem:[%s368 + $0x354] sm:$0xf]
                  %513 = vst [vmem:[%s369 + $0x11c] sm:$0xf] %v512
                  %v514 = vld [vmem:[%s368 + $0x360] sm:$0xf]
                  %515 = vst [vmem:[%s369 + $0x120] sm:$0xf] %v514
                  %v516 = vld [vmem:[%s368 + $0x36c] sm:$0xf]
                  %517 = vst [vmem:[%s369 + $0x124] sm:$0xf] %v516
                  %v518 = vld [vmem:[%s368 + $0x378] sm:$0xf]
                  %519 = vst [vmem:[%s369 + $0x128] sm:$0xf] %v518
                  %v520 = vld [vmem:[%s368 + $0x384] sm:$0xf]
                  %521 = vst [vmem:[%s369 + $0x12c] sm:$0xf] %v520
                  %v522 = vld [vmem:[%s368 + $0x390] sm:$0xf]
                  %523 = vst [vmem:[%s369 + $0x130] sm:$0xf] %v522
                  %v524 = vld [vmem:[%s368 + $0x39c] sm:$0xf]
                  %525 = vst [vmem:[%s369 + $0x134] sm:$0xf] %v524
                  %v526 = vld [vmem:[%s368 + $0x3a8] sm:$0xf]
                  %527 = vst [vmem:[%s369 + $0x138] sm:$0xf] %v526
                  %v528 = vld [vmem:[%s368 + $0x3b4] sm:$0xf]
                  %529 = vst [vmem:[%s369 + $0x13c] sm:$0xf] %v528
                  %v530 = vld [vmem:[%s368 + $0x3c0] sm:$0xf]
                  %531 = vst [vmem:[%s369 + $0x140] sm:$0xf] %v530
                  %v532 = vld [vmem:[%s368 + $0x3cc] sm:$0xf]
                  %533 = vst [vmem:[%s369 + $0x144] sm:$0xf] %v532
                  %v534 = vld [vmem:[%s368 + $0x3d8] sm:$0xf]
                  %535 = vst [vmem:[%s369 + $0x148] sm:$0xf] %v534
                  %v536 = vld [vmem:[%s368 + $0x3e4] sm:$0xf]
                  %537 = vst [vmem:[%s369 + $0x14c] sm:$0xf] %v536
                  %v538 = vld [vmem:[%s368 + $0x3f0] sm:$0xf]
                  %539 = vst [vmem:[%s369 + $0x150] sm:$0xf] %v538
                  %v540 = vld [vmem:[%s368 + $0x3fc] sm:$0xf]
                  %541 = vst [vmem:[%s369 + $0x154] sm:$0xf] %v540
                  %v542 = vld [vmem:[%s368 + $0x408] sm:$0xf]
                  %543 = vst [vmem:[%s369 + $0x158] sm:$0xf] %v542
                  %v544 = vld [vmem:[%s368 + $0x414] sm:$0xf]
                  %545 = vst [vmem:[%s369 + $0x15c] sm:$0xf] %v544
                  %v546 = vld [vmem:[%s368 + $0x420] sm:$0xf]
                  %547 = vst [vmem:[%s369 + $0x160] sm:$0xf] %v546
                  %v548 = vld [vmem:[%s368 + $0x42c] sm:$0xf]
                  %549 = vst [vmem:[%s369 + $0x164] sm:$0xf] %v548
                  %v550 = vld [vmem:[%s368 + $0x438] sm:$0xf]
                  %551 = vst [vmem:[%s369 + $0x168] sm:$0xf] %v550
                  %v552 = vld [vmem:[%s368 + $0x444] sm:$0xf]
                  %553 = vst [vmem:[%s369 + $0x16c] sm:$0xf] %v552
                  %v554 = vld [vmem:[%s368 + $0x450] sm:$0xf]
                  %555 = vst [vmem:[%s369 + $0x170] sm:$0xf] %v554
                  %v556 = vld [vmem:[%s368 + $0x45c] sm:$0xf]
                  %557 = vst [vmem:[%s369 + $0x174] sm:$0xf] %v556
                  %v558 = vld [vmem:[%s368 + $0x468] sm:$0xf]
                  %559 = vst [vmem:[%s369 + $0x178] sm:$0xf] %v558
                  %v560 = vld [vmem:[%s368 + $0x474] sm:$0xf]
                  %561 = vst [vmem:[%s369 + $0x17c] sm:$0xf] %v560
                  %v562 = vld [vmem:[%s368 + $0x480] sm:$0xf]
                  %563 = vst [vmem:[%s369 + $0x180] sm:$0xf] %v562
                  %v564 = vld [vmem:[%s368 + $0x48c] sm:$0xf]
                  %565 = vst [vmem:[%s369 + $0x184] sm:$0xf] %v564
                  %v566 = vld [vmem:[%s368 + $0x498] sm:$0xf]
                  %567 = vst [vmem:[%s369 + $0x188] sm:$0xf] %v566
                  %v568 = vld [vmem:[%s368 + $0x4a4] sm:$0xf]
                  %569 = vst [vmem:[%s369 + $0x18c] sm:$0xf] %v568
                  %v570 = vld [vmem:[%s368 + $0x4b0] sm:$0xf]
                  %571 = vst [vmem:[%s369 + $0x190] sm:$0xf] %v570
                  %v572 = vld [vmem:[%s368 + $0x4bc] sm:$0xf]
                  %573 = vst [vmem:[%s369 + $0x194] sm:$0xf] %v572
                  %v574 = vld [vmem:[%s368 + $0x4c8] sm:$0xf]
                  %575 = vst [vmem:[%s369 + $0x198] sm:$0xf] %v574
                  %v576 = vld [vmem:[%s368 + $0x4d4] sm:$0xf]
                  %577 = vst [vmem:[%s369 + $0x19c] sm:$0xf] %v576
                $region59: #{conv_transpose2d_silu.1} parent=46 // loop_footer
                  %s367 = sadd.s32 1, %s363
                $region60: #{conv_transpose2d_silu.1} parent=46 // loop_footer_branch
                  %362 = sbr.rel target = $region56
                $region61: #{conv_transpose2d_silu.1} parent=46 // loop_exit
                  _
              $region47: #{conv_transpose2d_silu.1} parent=31 // pred_fallthru
                _
            $region32: #{conv_transpose2d_silu.1} parent=27 // pred_fallthru
              _
            // Predicated region
            $region33: #{conv_transpose2d_silu.1} parent=27 // pred_check
              _
            $region34: #{conv_transpose2d_silu.1} parent=27 // pred_check_branch
              %133 = sbr.rel (0) target = $region36
            $region35: #{conv_transpose2d_silu.1} parent=27 // pred_region
              loop: start=0, step=1, limit=1
              $region37: #{conv_transpose2d_silu.1} parent=35 // loop_pre_header
                _
              $region38: #{conv_transpose2d_silu.1} parent=35 // loop_header
                %s136 = sphi 0, %s140
                %p137 = scmp.ge.s32.totalorder %s136, 1
                %s141 = sphi %s127, %s127
                %s142 = sphi %s123, %s123
              $region39: #{conv_transpose2d_silu.1} parent=35 // loop_header_branch
                %139 = sbr.rel (%p137) target = $region43
              $region40: #{conv_transpose2d_silu.1} parent=35 // loop_body
                %v143 = vld [vmem:[%s141] sm:$0xf]
                %144 = vst [vmem:[%s142] sm:$0xf] %v143
                %v145 = vld [vmem:[%s141 + $0xc] sm:$0xf]
                %146 = vst [vmem:[%s142 + $0x4] sm:$0xf] %v145
                %v147 = vld [vmem:[%s141 + $0x18] sm:$0xf]
                %148 = vst [vmem:[%s142 + $0x8] sm:$0xf] %v147
                %v149 = vld [vmem:[%s141 + $0x24] sm:$0xf]
                %150 = vst [vmem:[%s142 + $0xc] sm:$0xf] %v149
                %v151 = vld [vmem:[%s141 + $0x30] sm:$0xf]
                %152 = vst [vmem:[%s142 + $0x10] sm:$0xf] %v151
                %v153 = vld [vmem:[%s141 + $0x3c] sm:$0xf]
                %154 = vst [vmem:[%s142 + $0x14] sm:$0xf] %v153
                %v155 = vld [vmem:[%s141 + $0x48] sm:$0xf]
                %156 = vst [vmem:[%s142 + $0x18] sm:$0xf] %v155
                %v157 = vld [vmem:[%s141 + $0x54] sm:$0xf]
                %158 = vst [vmem:[%s142 + $0x1c] sm:$0xf] %v157
                %v159 = vld [vmem:[%s141 + $0x60] sm:$0xf]
                %160 = vst [vmem:[%s142 + $0x20] sm:$0xf] %v159
                %v161 = vld [vmem:[%s141 + $0x6c] sm:$0xf]
                %162 = vst [vmem:[%s142 + $0x24] sm:$0xf] %v161
                %v163 = vld [vmem:[%s141 + $0x78] sm:$0xf]
                %164 = vst [vmem:[%s142 + $0x28] sm:$0xf] %v163
                %v165 = vld [vmem:[%s141 + $0x84] sm:$0xf]
                %166 = vst [vmem:[%s142 + $0x2c] sm:$0xf] %v165
                %v167 = vld [vmem:[%s141 + $0x90] sm:$0xf]
                %168 = vst [vmem:[%s142 + $0x30] sm:$0xf] %v167
                %v169 = vld [vmem:[%s141 + $0x9c] sm:$0xf]
                %170 = vst [vmem:[%s142 + $0x34] sm:$0xf] %v169
                %v171 = vld [vmem:[%s141 + $0xa8] sm:$0xf]
                %172 = vst [vmem:[%s142 + $0x38] sm:$0xf] %v171
                %v173 = vld [vmem:[%s141 + $0xb4] sm:$0xf]
                %174 = vst [vmem:[%s142 + $0x3c] sm:$0xf] %v173
                %v175 = vld [vmem:[%s141 + $0xc0] sm:$0xf]
                %176 = vst [vmem:[%s142 + $0x40] sm:$0xf] %v175
                %v177 = vld [vmem:[%s141 + $0xcc] sm:$0xf]
                %178 = vst [vmem:[%s142 + $0x44] sm:$0xf] %v177
                %v179 = vld [vmem:[%s141 + $0xd8] sm:$0xf]
                %180 = vst [vmem:[%s142 + $0x48] sm:$0xf] %v179
                %v181 = vld [vmem:[%s141 + $0xe4] sm:$0xf]
                %182 = vst [vmem:[%s142 + $0x4c] sm:$0xf] %v181
                %v183 = vld [vmem:[%s141 + $0xf0] sm:$0xf]
                %184 = vst [vmem:[%s142 + $0x50] sm:$0xf] %v183
                %v185 = vld [vmem:[%s141 + $0xfc] sm:$0xf]
                %186 = vst [vmem:[%s142 + $0x54] sm:$0xf] %v185
                %v187 = vld [vmem:[%s141 + $0x108] sm:$0xf]
                %188 = vst [vmem:[%s142 + $0x58] sm:$0xf] %v187
                %v189 = vld [vmem:[%s141 + $0x114] sm:$0xf]
                %190 = vst [vmem:[%s142 + $0x5c] sm:$0xf] %v189
                %v191 = vld [vmem:[%s141 + $0x120] sm:$0xf]
                %192 = vst [vmem:[%s142 + $0x60] sm:$0xf] %v191
                %v193 = vld [vmem:[%s141 + $0x12c] sm:$0xf]
                %194 = vst [vmem:[%s142 + $0x64] sm:$0xf] %v193
                %v195 = vld [vmem:[%s141 + $0x138] sm:$0xf]
                %196 = vst [vmem:[%s142 + $0x68] sm:$0xf] %v195
                %v197 = vld [vmem:[%s141 + $0x144] sm:$0xf]
                %198 = vst [vmem:[%s142 + $0x6c] sm:$0xf] %v197
                %v199 = vld [vmem:[%s141 + $0x150] sm:$0xf]
                %200 = vst [vmem:[%s142 + $0x70] sm:$0xf] %v199
                %v201 = vld [vmem:[%s141 + $0x15c] sm:$0xf]
                %202 = vst [vmem:[%s142 + $0x74] sm:$0xf] %v201
                %v203 = vld [vmem:[%s141 + $0x168] sm:$0xf]
                %204 = vst [vmem:[%s142 + $0x78] sm:$0xf] %v203
                %v205 = vld [vmem:[%s141 + $0x174] sm:$0xf]
                %206 = vst [vmem:[%s142 + $0x7c] sm:$0xf] %v205
                %v207 = vld [vmem:[%s141 + $0x180] sm:$0xf]
                %208 = vst [vmem:[%s142 + $0x80] sm:$0xf] %v207
                %v209 = vld [vmem:[%s141 + $0x18c] sm:$0xf]
                %210 = vst [vmem:[%s142 + $0x84] sm:$0xf] %v209
                %v211 = vld [vmem:[%s141 + $0x198] sm:$0xf]
                %212 = vst [vmem:[%s142 + $0x88] sm:$0xf] %v211
                %v213 = vld [vmem:[%s141 + $0x1a4] sm:$0xf]
                %214 = vst [vmem:[%s142 + $0x8c] sm:$0xf] %v213
                %v215 = vld [vmem:[%s141 + $0x1b0] sm:$0xf]
                %216 = vst [vmem:[%s142 + $0x90] sm:$0xf] %v215
                %v217 = vld [vmem:[%s141 + $0x1bc] sm:$0xf]
                %218 = vst [vmem:[%s142 + $0x94] sm:$0xf] %v217
                %v219 = vld [vmem:[%s141 + $0x1c8] sm:$0xf]
                %220 = vst [vmem:[%s142 + $0x98] sm:$0xf] %v219
                %v221 = vld [vmem:[%s141 + $0x1d4] sm:$0xf]
                %222 = vst [vmem:[%s142 + $0x9c] sm:$0xf] %v221
                %v223 = vld [vmem:[%s141 + $0x1e0] sm:$0xf]
                %224 = vst [vmem:[%s142 + $0xa0] sm:$0xf] %v223
                %v225 = vld [vmem:[%s141 + $0x1ec] sm:$0xf]
                %226 = vst [vmem:[%s142 + $0xa4] sm:$0xf] %v225
                %v227 = vld [vmem:[%s141 + $0x1f8] sm:$0xf]
                %228 = vst [vmem:[%s142 + $0xa8] sm:$0xf] %v227
                %v229 = vld [vmem:[%s141 + $0x204] sm:$0xf]
                %230 = vst [vmem:[%s142 + $0xac] sm:$0xf] %v229
                %v231 = vld [vmem:[%s141 + $0x210] sm:$0xf]
                %232 = vst [vmem:[%s142 + $0xb0] sm:$0xf] %v231
                %v233 = vld [vmem:[%s141 + $0x21c] sm:$0xf]
                %234 = vst [vmem:[%s142 + $0xb4] sm:$0xf] %v233
                %v235 = vld [vmem:[%s141 + $0x228] sm:$0xf]
                %236 = vst [vmem:[%s142 + $0xb8] sm:$0xf] %v235
                %v237 = vld [vmem:[%s141 + $0x234] sm:$0xf]
                %238 = vst [vmem:[%s142 + $0xbc] sm:$0xf] %v237
                %v239 = vld [vmem:[%s141 + $0x240] sm:$0xf]
                %240 = vst [vmem:[%s142 + $0xc0] sm:$0xf] %v239
                %v241 = vld [vmem:[%s141 + $0x24c] sm:$0xf]
                %242 = vst [vmem:[%s142 + $0xc4] sm:$0xf] %v241
                %v243 = vld [vmem:[%s141 + $0x258] sm:$0xf]
                %244 = vst [vmem:[%s142 + $0xc8] sm:$0xf] %v243
                %v245 = vld [vmem:[%s141 + $0x264] sm:$0xf]
                %246 = vst [vmem:[%s142 + $0xcc] sm:$0xf] %v245
                %v247 = vld [vmem:[%s141 + $0x270] sm:$0xf]
                %248 = vst [vmem:[%s142 + $0xd0] sm:$0xf] %v247
                %v249 = vld [vmem:[%s141 + $0x27c] sm:$0xf]
                %250 = vst [vmem:[%s142 + $0xd4] sm:$0xf] %v249
                %v251 = vld [vmem:[%s141 + $0x288] sm:$0xf]
                %252 = vst [vmem:[%s142 + $0xd8] sm:$0xf] %v251
                %v253 = vld [vmem:[%s141 + $0x294] sm:$0xf]
                %254 = vst [vmem:[%s142 + $0xdc] sm:$0xf] %v253
                %v255 = vld [vmem:[%s141 + $0x2a0] sm:$0xf]
                %256 = vst [vmem:[%s142 + $0xe0] sm:$0xf] %v255
                %v257 = vld [vmem:[%s141 + $0x2ac] sm:$0xf]
                %258 = vst [vmem:[%s142 + $0xe4] sm:$0xf] %v257
                %v259 = vld [vmem:[%s141 + $0x2b8] sm:$0xf]
                %260 = vst [vmem:[%s142 + $0xe8] sm:$0xf] %v259
                %v261 = vld [vmem:[%s141 + $0x2c4] sm:$0xf]
                %262 = vst [vmem:[%s142 + $0xec] sm:$0xf] %v261
                %v263 = vld [vmem:[%s141 + $0x2d0] sm:$0xf]
                %264 = vst [vmem:[%s142 + $0xf0] sm:$0xf] %v263
                %v265 = vld [vmem:[%s141 + $0x2dc] sm:$0xf]
                %266 = vst [vmem:[%s142 + $0xf4] sm:$0xf] %v265
                %v267 = vld [vmem:[%s141 + $0x2e8] sm:$0xf]
                %268 = vst [vmem:[%s142 + $0xf8] sm:$0xf] %v267
                %v269 = vld [vmem:[%s141 + $0x2f4] sm:$0xf]
                %270 = vst [vmem:[%s142 + $0xfc] sm:$0xf] %v269
                %v271 = vld [vmem:[%s141 + $0x300] sm:$0xf]
                %272 = vst [vmem:[%s142 + $0x100] sm:$0xf] %v271
                %v273 = vld [vmem:[%s141 + $0x30c] sm:$0xf]
                %274 = vst [vmem:[%s142 + $0x104] sm:$0xf] %v273
                %v275 = vld [vmem:[%s141 + $0x318] sm:$0xf]
                %276 = vst [vmem:[%s142 + $0x108] sm:$0xf] %v275
                %v277 = vld [vmem:[%s141 + $0x324] sm:$0xf]
                %278 = vst [vmem:[%s142 + $0x10c] sm:$0xf] %v277
                %v279 = vld [vmem:[%s141 + $0x330] sm:$0xf]
                %280 = vst [vmem:[%s142 + $0x110] sm:$0xf] %v279
                %v281 = vld [vmem:[%s141 + $0x33c] sm:$0xf]
                %282 = vst [vmem:[%s142 + $0x114] sm:$0xf] %v281
                %v283 = vld [vmem:[%s141 + $0x348] sm:$0xf]
                %284 = vst [vmem:[%s142 + $0x118] sm:$0xf] %v283
                %v285 = vld [vmem:[%s141 + $0x354] sm:$0xf]
                %286 = vst [vmem:[%s142 + $0x11c] sm:$0xf] %v285
                %v287 = vld [vmem:[%s141 + $0x360] sm:$0xf]
                %288 = vst [vmem:[%s142 + $0x120] sm:$0xf] %v287
                %v289 = vld [vmem:[%s141 + $0x36c] sm:$0xf]
                %290 = vst [vmem:[%s142 + $0x124] sm:$0xf] %v289
                %v291 = vld [vmem:[%s141 + $0x378] sm:$0xf]
                %292 = vst [vmem:[%s142 + $0x128] sm:$0xf] %v291
                %v293 = vld [vmem:[%s141 + $0x384] sm:$0xf]
                %294 = vst [vmem:[%s142 + $0x12c] sm:$0xf] %v293
                %v295 = vld [vmem:[%s141 + $0x390] sm:$0xf]
                %296 = vst [vmem:[%s142 + $0x130] sm:$0xf] %v295
                %v297 = vld [vmem:[%s141 + $0x39c] sm:$0xf]
                %298 = vst [vmem:[%s142 + $0x134] sm:$0xf] %v297
                %v299 = vld [vmem:[%s141 + $0x3a8] sm:$0xf]
                %300 = vst [vmem:[%s142 + $0x138] sm:$0xf] %v299
                %v301 = vld [vmem:[%s141 + $0x3b4] sm:$0xf]
                %302 = vst [vmem:[%s142 + $0x13c] sm:$0xf] %v301
                %v303 = vld [vmem:[%s141 + $0x3c0] sm:$0xf]
                %304 = vst [vmem:[%s142 + $0x140] sm:$0xf] %v303
                %v305 = vld [vmem:[%s141 + $0x3cc] sm:$0xf]
                %306 = vst [vmem:[%s142 + $0x144] sm:$0xf] %v305
                %v307 = vld [vmem:[%s141 + $0x3d8] sm:$0xf]
                %308 = vst [vmem:[%s142 + $0x148] sm:$0xf] %v307
                %v309 = vld [vmem:[%s141 + $0x3e4] sm:$0xf]
                %310 = vst [vmem:[%s142 + $0x14c] sm:$0xf] %v309
                %v311 = vld [vmem:[%s141 + $0x3f0] sm:$0xf]
                %312 = vst [vmem:[%s142 + $0x150] sm:$0xf] %v311
                %v313 = vld [vmem:[%s141 + $0x3fc] sm:$0xf]
                %314 = vst [vmem:[%s142 + $0x154] sm:$0xf] %v313
                %v315 = vld [vmem:[%s141 + $0x408] sm:$0xf]
                %316 = vst [vmem:[%s142 + $0x158] sm:$0xf] %v315
                %v317 = vld [vmem:[%s141 + $0x414] sm:$0xf]
                %318 = vst [vmem:[%s142 + $0x15c] sm:$0xf] %v317
                %v319 = vld [vmem:[%s141 + $0x420] sm:$0xf]
                %320 = vst [vmem:[%s142 + $0x160] sm:$0xf] %v319
                %v321 = vld [vmem:[%s141 + $0x42c] sm:$0xf]
                %322 = vst [vmem:[%s142 + $0x164] sm:$0xf] %v321
                %v323 = vld [vmem:[%s141 + $0x438] sm:$0xf]
                %324 = vst [vmem:[%s142 + $0x168] sm:$0xf] %v323
                %v325 = vld [vmem:[%s141 + $0x444] sm:$0xf]
                %326 = vst [vmem:[%s142 + $0x16c] sm:$0xf] %v325
                %v327 = vld [vmem:[%s141 + $0x450] sm:$0xf]
                %328 = vst [vmem:[%s142 + $0x170] sm:$0xf] %v327
                %v329 = vld [vmem:[%s141 + $0x45c] sm:$0xf]
                %330 = vst [vmem:[%s142 + $0x174] sm:$0xf] %v329
                %v331 = vld [vmem:[%s141 + $0x468] sm:$0xf]
                %332 = vst [vmem:[%s142 + $0x178] sm:$0xf] %v331
                %v333 = vld [vmem:[%s141 + $0x474] sm:$0xf]
                %334 = vst [vmem:[%s142 + $0x17c] sm:$0xf] %v333
                %v335 = vld [vmem:[%s141 + $0x480] sm:$0xf]
                %336 = vst [vmem:[%s142 + $0x180] sm:$0xf] %v335
                %v337 = vld [vmem:[%s141 + $0x48c] sm:$0xf]
                %338 = vst [vmem:[%s142 + $0x184] sm:$0xf] %v337
                %v339 = vld [vmem:[%s141 + $0x498] sm:$0xf]
                %340 = vst [vmem:[%s142 + $0x188] sm:$0xf] %v339
                %v341 = vld [vmem:[%s141 + $0x4a4] sm:$0xf]
                %342 = vst [vmem:[%s142 + $0x18c] sm:$0xf] %v341
                %v343 = vld [vmem:[%s141 + $0x4b0] sm:$0xf]
                %344 = vst [vmem:[%s142 + $0x190] sm:$0xf] %v343
                %v345 = vld [vmem:[%s141 + $0x4bc] sm:$0xf]
                %346 = vst [vmem:[%s142 + $0x194] sm:$0xf] %v345
                %v347 = vld [vmem:[%s141 + $0x4c8] sm:$0xf]
                %348 = vst [vmem:[%s142 + $0x198] sm:$0xf] %v347
                %v349 = vld [vmem:[%s141 + $0x4d4] sm:$0xf]
                %350 = vst [vmem:[%s142 + $0x19c] sm:$0xf] %v349
              $region41: #{conv_transpose2d_silu.1} parent=35 // loop_footer
                %s140 = sadd.s32 1, %s136
              $region42: #{conv_transpose2d_silu.1} parent=35 // loop_footer_branch
                %135 = sbr.rel target = $region38
              $region43: #{conv_transpose2d_silu.1} parent=35 // loop_exit
                _
            $region36: #{conv_transpose2d_silu.1} parent=27 // pred_fallthru
              _
          $region28: #{conv_transpose2d_silu.1} parent=23 // pred_fallthru
            _
          %578 = vnop
        $region24: #{conv_transpose2d_silu.1} parent=19 // pred_fallthru
          _
      $region20: #{conv_transpose2d_silu.1} parent=5 // pred_fallthru
        _
      %p579 = scmp.le.s32.totalorder 1, %s8
      %p580 = scmp.lt.s32.totalorder %s8, 7
      %p581 = pnand %p579, %p580
      %p582 = pneg %p581
      // Predicated region
      $region62: #{conv_transpose2d_silu.1} parent=5 // pred_check
        _
      $region63: #{conv_transpose2d_silu.1} parent=5 // pred_check_branch
        %584 = sbr.rel (%p581) target = $region65
      $region64: #{conv_transpose2d_silu.1} parent=5 // pred_region
        %s585 = ssub.s32 %s8, 1
        %s586 = sand.u32 %s35, 1
        %s587 = sand.u32 %s35, 1
        %s588 = smul.addr %s587, 416
        %s589 = scalar_lea.vmem [#allocation2], %s588
        // Predicated region
        $region66: #{conv_transpose2d_silu.1} parent=64 // pred_check
          %p590 = pneg %p48
        $region67: #{conv_transpose2d_silu.1} parent=64 // pred_check_branch
          %592 = sbr.rel (%p590) target = $region69
        $region68: #{conv_transpose2d_silu.1} parent=64 // pred_region
          _
        $region69: #{conv_transpose2d_silu.1} parent=64 // pred_fallthru
          _
        %s593 = sand.u32 %s35, 1
        %s594 = sand.u32 %s35, 1
        %s595 = smul.addr %s594, 416
        %s596 = scalar_lea.vmem [#allocation2], %s595
        %p597 = pneg %p48
        %p598 = pneg %p45
        %p599 = pneg %p69
        %p600 = pneg %p66
        %p601 = pneg %p95
        %p602 = pneg %p92
        %p603 = scmp.lt.s32.totalorder %s17, 1
        %s604 = scalar_select %p603, %s17, 1
        %s605 = smul.addr %s604, 136
        %s606 = smul.addr %s605, 8
        %s607 = scalar_lea.vmem %s2, %s606
        %p608 = scmp.lt.s32.totalorder %s17, 1
        %s609 = scalar_select %p608, %s17, 1
        %s610 = smul.addr %s609, 136
        %s611 = smul.addr %s610, 8
        %s612 = scalar_lea.vmem %s2, %s611
        %p614 = scmp.eq.s32.totalorder %s18, 0
        // Predicated region
        $region70: #{conv_transpose2d_silu.1} parent=64 // pred_check
          %p615 = pneg %p614
        $region71: #{conv_transpose2d_silu.1} parent=64 // pred_check_branch
          %617 = sbr.rel (%p615) target = $region73
        $region72: #{conv_transpose2d_silu.1} parent=64 // pred_region
          %618 = vst [vmem:[%s612] sm:$0xff] 0.0
          %619 = vst [vmem:[%s612 + $0x8] sm:$0xff] 0.0
          %620 = vst [vmem:[%s612 + $0x10] sm:$0xff] 0.0
          %621 = vst [vmem:[%s612 + $0x18] sm:$0xff] 0.0
          %622 = vst [vmem:[%s612 + $0x20] sm:$0xff] 0.0
          %623 = vst [vmem:[%s612 + $0x28] sm:$0xff] 0.0
          %624 = vst [vmem:[%s612 + $0x30] sm:$0xff] 0.0
          %625 = vst [vmem:[%s612 + $0x38] sm:$0xff] 0.0
          %626 = vst [vmem:[%s612 + $0x40] sm:$0xff] 0.0
          %627 = vst [vmem:[%s612 + $0x48] sm:$0xff] 0.0
          %628 = vst [vmem:[%s612 + $0x50] sm:$0xff] 0.0
          %629 = vst [vmem:[%s612 + $0x58] sm:$0xff] 0.0
          %630 = vst [vmem:[%s612 + $0x60] sm:$0xff] 0.0
          %631 = vst [vmem:[%s612 + $0x68] sm:$0xff] 0.0
          %632 = vst [vmem:[%s612 + $0x70] sm:$0xff] 0.0
          %633 = vst [vmem:[%s612 + $0x78] sm:$0xff] 0.0
          %634 = vst [vmem:[%s612 + $0x80] sm:$0xff] 0.0
          %635 = vst [vmem:[%s612 + $0x88] sm:$0xff] 0.0
          %636 = vst [vmem:[%s612 + $0x90] sm:$0xff] 0.0
          %637 = vst [vmem:[%s612 + $0x98] sm:$0xff] 0.0
          %638 = vst [vmem:[%s612 + $0xa0] sm:$0xff] 0.0
          %639 = vst [vmem:[%s612 + $0xa8] sm:$0xff] 0.0
          %640 = vst [vmem:[%s612 + $0xb0] sm:$0xff] 0.0
          %641 = vst [vmem:[%s612 + $0xb8] sm:$0xff] 0.0
          %642 = vst [vmem:[%s612 + $0xc0] sm:$0xff] 0.0
          %643 = vst [vmem:[%s612 + $0xc8] sm:$0xff] 0.0
          %644 = vst [vmem:[%s612 + $0xd0] sm:$0xff] 0.0
          %645 = vst [vmem:[%s612 + $0xd8] sm:$0xff] 0.0
          %646 = vst [vmem:[%s612 + $0xe0] sm:$0xff] 0.0
          %647 = vst [vmem:[%s612 + $0xe8] sm:$0xff] 0.0
          %648 = vst [vmem:[%s612 + $0xf0] sm:$0xff] 0.0
          %649 = vst [vmem:[%s612 + $0xf8] sm:$0xff] 0.0
          %650 = vst [vmem:[%s612 + $0x100] sm:$0xff] 0.0
          %651 = vst [vmem:[%s612 + $0x108] sm:$0xff] 0.0
          %652 = vst [vmem:[%s612 + $0x110] sm:$0xff] 0.0
          %653 = vst [vmem:[%s612 + $0x118] sm:$0xff] 0.0
          %654 = vst [vmem:[%s612 + $0x120] sm:$0xff] 0.0
          %655 = vst [vmem:[%s612 + $0x128] sm:$0xff] 0.0
          %656 = vst [vmem:[%s612 + $0x130] sm:$0xff] 0.0
          %657 = vst [vmem:[%s612 + $0x138] sm:$0xff] 0.0
          %658 = vst [vmem:[%s612 + $0x140] sm:$0xff] 0.0
          %659 = vst [vmem:[%s612 + $0x148] sm:$0xff] 0.0
          %660 = vst [vmem:[%s612 + $0x150] sm:$0xff] 0.0
          %661 = vst [vmem:[%s612 + $0x158] sm:$0xff] 0.0
          %662 = vst [vmem:[%s612 + $0x160] sm:$0xff] 0.0
          %663 = vst [vmem:[%s612 + $0x168] sm:$0xff] 0.0
          %664 = vst [vmem:[%s612 + $0x170] sm:$0xff] 0.0
          %665 = vst [vmem:[%s612 + $0x178] sm:$0xff] 0.0
          %666 = vst [vmem:[%s612 + $0x180] sm:$0xff] 0.0
          %667 = vst [vmem:[%s612 + $0x188] sm:$0xff] 0.0
          %668 = vst [vmem:[%s612 + $0x190] sm:$0xff] 0.0
          %669 = vst [vmem:[%s612 + $0x198] sm:$0xff] 0.0
          %670 = vst [vmem:[%s612 + $0x1a0] sm:$0xff] 0.0
          %671 = vst [vmem:[%s612 + $0x1a8] sm:$0xff] 0.0
          %672 = vst [vmem:[%s612 + $0x1b0] sm:$0xff] 0.0
          %673 = vst [vmem:[%s612 + $0x1b8] sm:$0xff] 0.0
          %674 = vst [vmem:[%s612 + $0x1c0] sm:$0xff] 0.0
          %675 = vst [vmem:[%s612 + $0x1c8] sm:$0xff] 0.0
          %676 = vst [vmem:[%s612 + $0x1d0] sm:$0xff] 0.0
          %677 = vst [vmem:[%s612 + $0x1d8] sm:$0xff] 0.0
          %678 = vst [vmem:[%s612 + $0x1e0] sm:$0xff] 0.0
          %679 = vst [vmem:[%s612 + $0x1e8] sm:$0xff] 0.0
          %680 = vst [vmem:[%s612 + $0x1f0] sm:$0xff] 0.0
          %681 = vst [vmem:[%s612 + $0x1f8] sm:$0xff] 0.0
          %682 = vst [vmem:[%s612 + $0x200] sm:$0xff] 0.0
          %683 = vst [vmem:[%s612 + $0x208] sm:$0xff] 0.0
          %684 = vst [vmem:[%s612 + $0x210] sm:$0xff] 0.0
          %685 = vst [vmem:[%s612 + $0x218] sm:$0xff] 0.0
          %686 = vst [vmem:[%s612 + $0x220] sm:$0xff] 0.0
          %687 = vst [vmem:[%s612 + $0x228] sm:$0xff] 0.0
          %688 = vst [vmem:[%s612 + $0x230] sm:$0xff] 0.0
          %689 = vst [vmem:[%s612 + $0x238] sm:$0xff] 0.0
          %690 = vst [vmem:[%s612 + $0x240] sm:$0xff] 0.0
          %691 = vst [vmem:[%s612 + $0x248] sm:$0xff] 0.0
          %692 = vst [vmem:[%s612 + $0x250] sm:$0xff] 0.0
          %693 = vst [vmem:[%s612 + $0x258] sm:$0xff] 0.0
          %694 = vst [vmem:[%s612 + $0x260] sm:$0xff] 0.0
          %695 = vst [vmem:[%s612 + $0x268] sm:$0xff] 0.0
          %696 = vst [vmem:[%s612 + $0x270] sm:$0xff] 0.0
          %697 = vst [vmem:[%s612 + $0x278] sm:$0xff] 0.0
          %698 = vst [vmem:[%s612 + $0x280] sm:$0xff] 0.0
          %699 = vst [vmem:[%s612 + $0x288] sm:$0xff] 0.0
          %700 = vst [vmem:[%s612 + $0x290] sm:$0xff] 0.0
          %701 = vst [vmem:[%s612 + $0x298] sm:$0xff] 0.0
          %702 = vst [vmem:[%s612 + $0x2a0] sm:$0xff] 0.0
          %703 = vst [vmem:[%s612 + $0x2a8] sm:$0xff] 0.0
          %704 = vst [vmem:[%s612 + $0x2b0] sm:$0xff] 0.0
          %705 = vst [vmem:[%s612 + $0x2b8] sm:$0xff] 0.0
          %706 = vst [vmem:[%s612 + $0x2c0] sm:$0xff] 0.0
          %707 = vst [vmem:[%s612 + $0x2c8] sm:$0xff] 0.0
          %708 = vst [vmem:[%s612 + $0x2d0] sm:$0xff] 0.0
          %709 = vst [vmem:[%s612 + $0x2d8] sm:$0xff] 0.0
          %710 = vst [vmem:[%s612 + $0x2e0] sm:$0xff] 0.0
          %711 = vst [vmem:[%s612 + $0x2e8] sm:$0xff] 0.0
          %712 = vst [vmem:[%s612 + $0x2f0] sm:$0xff] 0.0
          %713 = vst [vmem:[%s612 + $0x2f8] sm:$0xff] 0.0
          %714 = vst [vmem:[%s612 + $0x300] sm:$0xff] 0.0
          %715 = vst [vmem:[%s612 + $0x308] sm:$0xff] 0.0
          %716 = vst [vmem:[%s612 + $0x310] sm:$0xff] 0.0
          %717 = vst [vmem:[%s612 + $0x318] sm:$0xff] 0.0
          %718 = vst [vmem:[%s612 + $0x320] sm:$0xff] 0.0
          %719 = vst [vmem:[%s612 + $0x328] sm:$0xff] 0.0
          %720 = vst [vmem:[%s612 + $0x330] sm:$0xff] 0.0
          %721 = vst [vmem:[%s612 + $0x338] sm:$0xff] 0.0
          %722 = vst [vmem:[%s612 + $0x340] sm:$0xff] 0.0
          %723 = vst [vmem:[%s612 + $0x348] sm:$0xff] 0.0
          %724 = vst [vmem:[%s612 + $0x350] sm:$0xff] 0.0
          %725 = vst [vmem:[%s612 + $0x358] sm:$0xff] 0.0
          %726 = vst [vmem:[%s612 + $0x360] sm:$0xff] 0.0
          %727 = vst [vmem:[%s612 + $0x368] sm:$0xff] 0.0
          %728 = vst [vmem:[%s612 + $0x370] sm:$0xff] 0.0
          %729 = vst [vmem:[%s612 + $0x378] sm:$0xff] 0.0
          %730 = vst [vmem:[%s612 + $0x380] sm:$0xff] 0.0
          %731 = vst [vmem:[%s612 + $0x388] sm:$0xff] 0.0
          %732 = vst [vmem:[%s612 + $0x390] sm:$0xff] 0.0
          %733 = vst [vmem:[%s612 + $0x398] sm:$0xff] 0.0
          %734 = vst [vmem:[%s612 + $0x3a0] sm:$0xff] 0.0
          %735 = vst [vmem:[%s612 + $0x3a8] sm:$0xff] 0.0
          %736 = vst [vmem:[%s612 + $0x3b0] sm:$0xff] 0.0
          %737 = vst [vmem:[%s612 + $0x3b8] sm:$0xff] 0.0
          %738 = vst [vmem:[%s612 + $0x3c0] sm:$0xff] 0.0
          %739 = vst [vmem:[%s612 + $0x3c8] sm:$0xff] 0.0
          %740 = vst [vmem:[%s612 + $0x3d0] sm:$0xff] 0.0
          %741 = vst [vmem:[%s612 + $0x3d8] sm:$0xff] 0.0
          %742 = vst [vmem:[%s612 + $0x3e0] sm:$0xff] 0.0
          %743 = vst [vmem:[%s612 + $0x3e8] sm:$0xff] 0.0
          %744 = vst [vmem:[%s612 + $0x3f0] sm:$0xff] 0.0
          %745 = vst [vmem:[%s612 + $0x3f8] sm:$0xff] 0.0
          %746 = vst [vmem:[%s612 + $0x400] sm:$0xff] 0.0
          %747 = vst [vmem:[%s612 + $0x408] sm:$0xff] 0.0
          %748 = vst [vmem:[%s612 + $0x410] sm:$0xff] 0.0
          %749 = vst [vmem:[%s612 + $0x418] sm:$0xff] 0.0
          %750 = vst [vmem:[%s612 + $0x420] sm:$0xff] 0.0
          %751 = vst [vmem:[%s612 + $0x428] sm:$0xff] 0.0
          %752 = vst [vmem:[%s612 + $0x430] sm:$0xff] 0.0
          %753 = vst [vmem:[%s612 + $0x438] sm:$0xff] 0.0
        $region73: #{conv_transpose2d_silu.1} parent=64 // pred_fallthru
          _
        %s754 = smul.u32 %s18, 128
        loop: start=0, step=1, limit=5
        $region74: #{conv_transpose2d_silu.1} parent=64 // loop_pre_header
          _
        $region75: #{conv_transpose2d_silu.1} parent=64 // loop_header
          %s756 = sphi 0, %s760
          %p757 = scmp.ge.s32.totalorder %s756, 5
        $region76: #{conv_transpose2d_silu.1} parent=64 // loop_header_branch
          %759 = sbr.rel (%p757) target = $region80
        $region77: #{conv_transpose2d_silu.1} parent=64 // loop_body
          %s761 = smul.u32 %s756, 96
          %s762 = sshra.s32 %s761, 3
          %s763 = sand.u32 %s761, 7
          %s764 = smul.addr %s762, 4
          %s765 = scalar_lea.vmem %s589, %s764 [#allocation2]
          %v766 = vld [vmem:[%s765] sm:$0xf]
          %v767 = vld [vmem:[%s765 + $0x4] sm:$0xf]
          %v768 = vld [vmem:[%s765 + $0x8] sm:$0xf]
          %v769 = vld [vmem:[%s765 + $0xc] sm:$0xf]
          %v770 = vld [vmem:[%s765 + $0x10] sm:$0xf]
          %v771 = vld [vmem:[%s765 + $0x14] sm:$0xf]
          %v772 = vld [vmem:[%s765 + $0x18] sm:$0xf]
          %v773 = vld [vmem:[%s765 + $0x1c] sm:$0xf]
          %v774 = vld [vmem:[%s765 + $0x20] sm:$0xf]
          %v775 = vld [vmem:[%s765 + $0x24] sm:$0xf]
          %v776 = vld [vmem:[%s765 + $0x28] sm:$0xf]
          %v777 = vld [vmem:[%s765 + $0x2c] sm:$0xf]
          %s778 = sshra.s32 %s754, 3
          %s779 = sand.u32 %s754, 7
          %s780 = smul.u32 %s778, 2
          %s781 = smul.addr %s780, 4
          %s782 = scalar_lea.vmem %s1, %s781
          %v783 = vld [vmem:[%s782] sm:$0xff]
          %v784 = vld [vmem:[%s782 + $0x8] sm:$0xff]
          %v785 = vld [vmem:[%s782 + $0x10] sm:$0xff]
          %v786 = vld [vmem:[%s782 + $0x18] sm:$0xff]
          %v787 = vld [vmem:[%s782 + $0x20] sm:$0xff]
          %v788 = vld [vmem:[%s782 + $0x28] sm:$0xff]
          %v789 = vld [vmem:[%s782 + $0x30] sm:$0xff]
          %v790 = vld [vmem:[%s782 + $0x38] sm:$0xff]
          %v791 = vld [vmem:[%s782 + $0x40] sm:$0xff]
          %v792 = vld [vmem:[%s782 + $0x48] sm:$0xff]
          %v793 = vld [vmem:[%s782 + $0x50] sm:$0xff]
          %v794 = vld [vmem:[%s782 + $0x58] sm:$0xff]
          %v795 = vld [vmem:[%s782 + $0x60] sm:$0xff]
          %v796 = vld [vmem:[%s782 + $0x68] sm:$0xff]
          %v797 = vld [vmem:[%s782 + $0x70] sm:$0xff]
          %v798 = vld [vmem:[%s782 + $0x78] sm:$0xff]
          %s799 = sadd.s32 %s761, 96
          %s800 = sshra.s32 %s799, 3
          %s801 = sand.u32 %s799, 7
          %s802 = smul.addr %s800, 4
          %s803 = scalar_lea.vmem %s589, %s802 [#allocation2]
          %v804 = vld [vmem:[%s803] sm:$0xf]
          %v805 = vld [vmem:[%s803 + $0x4] sm:$0xf]
          %v806 = vld [vmem:[%s803 + $0x8] sm:$0xf]
          %v807 = vld [vmem:[%s803 + $0xc] sm:$0xf]
          %v808 = vld [vmem:[%s803 + $0x10] sm:$0xf]
          %v809 = vld [vmem:[%s803 + $0x14] sm:$0xf]
          %v810 = vld [vmem:[%s803 + $0x18] sm:$0xf]
          %v811 = vld [vmem:[%s803 + $0x1c] sm:$0xf]
          %v812 = vld [vmem:[%s803 + $0x20] sm:$0xf]
          %v813 = vld [vmem:[%s803 + $0x24] sm:$0xf]
          %v814 = vld [vmem:[%s803 + $0x28] sm:$0xf]
          %v815 = vld [vmem:[%s803 + $0x2c] sm:$0xf]
          %s816 = sadd.s32 %s780, 96
          %s817 = smul.addr %s816, 4
          %s818 = scalar_lea.vmem %s1, %s817
          %v819 = vld [vmem:[%s818] sm:$0xff]
          %v820 = vld [vmem:[%s818 + $0x8] sm:$0xff]
          %v821 = vld [vmem:[%s818 + $0x10] sm:$0xff]
          %v822 = vld [vmem:[%s818 + $0x18] sm:$0xff]
          %v823 = vld [vmem:[%s818 + $0x20] sm:$0xff]
          %v824 = vld [vmem:[%s818 + $0x28] sm:$0xff]
          %v825 = vld [vmem:[%s818 + $0x30] sm:$0xff]
          %v826 = vld [vmem:[%s818 + $0x38] sm:$0xff]
          %v827 = vld [vmem:[%s818 + $0x40] sm:$0xff]
          %v828 = vld [vmem:[%s818 + $0x48] sm:$0xff]
          %v829 = vld [vmem:[%s818 + $0x50] sm:$0xff]
          %v830 = vld [vmem:[%s818 + $0x58] sm:$0xff]
          %v831 = vld [vmem:[%s818 + $0x60] sm:$0xff]
          %v832 = vld [vmem:[%s818 + $0x68] sm:$0xff]
          %v833 = vld [vmem:[%s818 + $0x70] sm:$0xff]
          %v834 = vld [vmem:[%s818 + $0x78] sm:$0xff]
          %v847 = vunpack.c.l.b16 %v804
          %v848 = vunpack.c.l.b16 %v805
          %v849 = vunpack.c.l.b16 %v806
          %v850 = vunpack.c.l.b16 %v807
          %v851 = vunpack.c.l.b16 %v808
          %v852 = vunpack.c.l.b16 %v809
          %v853 = vunpack.c.l.b16 %v810
          %v854 = vunpack.c.l.b16 %v811
          %v855 = vunpack.c.l.b16 %v812
          %v856 = vunpack.c.l.b16 %v813
          %v857 = vunpack.c.l.b16 %v814
          %v858 = vunpack.c.l.b16 %v815
          %v859 = vpack.c.b16 %v848, %v847
          %v860 = vpack.c.b16 %v850, %v849
          %v861 = vpack.c.b16 %v852, %v851
          %v862 = vpack.c.b16 %v854, %v853
          %v863 = vpack.c.b16 %v856, %v855
          %v864 = vpack.c.b16 %v858, %v857
          %v887 = vunpack.c.l.b16 %v819
          %v888 = vunpack.c.h.b16 %v819
          %v889 = vunpack.c.l.b16 %v820
          %v890 = vunpack.c.h.b16 %v820
          %v891 = vunpack.c.l.b16 %v821
          %v892 = vunpack.c.h.b16 %v821
          %v893 = vunpack.c.l.b16 %v822
          %v894 = vunpack.c.h.b16 %v822
          %v895 = vunpack.c.l.b16 %v823
          %v896 = vunpack.c.h.b16 %v823
          %v897 = vunpack.c.l.b16 %v824
          %v898 = vunpack.c.h.b16 %v824
          %v899 = vunpack.c.l.b16 %v825
          %v900 = vunpack.c.h.b16 %v825
          %v901 = vunpack.c.l.b16 %v826
          %v902 = vunpack.c.h.b16 %v826
          %v903 = vunpack.c.l.b16 %v827
          %v904 = vunpack.c.h.b16 %v827
          %v905 = vunpack.c.l.b16 %v828
          %v906 = vunpack.c.h.b16 %v828
          %v907 = vunpack.c.l.b16 %v829
          %v908 = vunpack.c.h.b16 %v829
          %v909 = vunpack.c.l.b16 %v830
          %v910 = vunpack.c.h.b16 %v830
          %v911 = vunpack.c.l.b16 %v831
          %v912 = vunpack.c.h.b16 %v831
          %v913 = vunpack.c.l.b16 %v832
          %v914 = vunpack.c.h.b16 %v832
          %v915 = vunpack.c.l.b16 %v833
          %v916 = vunpack.c.h.b16 %v833
          %v917 = vunpack.c.l.b16 %v834
          %v918 = vunpack.c.h.b16 %v834
          %v919 = vpack.c.b16 %v889, %v887
          %v920 = vpack.c.b16 %v890, %v888
          %v921 = vpack.c.b16 %v893, %v891
          %v922 = vpack.c.b16 %v894, %v892
          %v923 = vpack.c.b16 %v897, %v895
          %v924 = vpack.c.b16 %v898, %v896
          %v925 = vpack.c.b16 %v901, %v899
          %v926 = vpack.c.b16 %v902, %v900
          %v927 = vpack.c.b16 %v905, %v903
          %v928 = vpack.c.b16 %v906, %v904
          %v929 = vpack.c.b16 %v909, %v907
          %v930 = vpack.c.b16 %v910, %v908
          %v931 = vpack.c.b16 %v913, %v911
          %v932 = vpack.c.b16 %v914, %v912
          %v933 = vpack.c.b16 %v917, %v915
          %v934 = vpack.c.b16 %v918, %v916
          %951 = vmatprep.subr.bf16.mxu0 %v920
          %952 = vmatpush1.bf16.msra.mxu0 %v919
          %953 = vmatprep.subr.bf16.mxu0 %v922
          %954 = vmatpush1.bf16.msra.mxu0 %v921
          %955 = vmatprep.subr.bf16.mxu0 %v924
          %956 = vmatpush1.bf16.msra.mxu0 %v923
          %957 = vmatprep.subr.bf16.mxu0 %v926
          %958 = vmatpush1.bf16.msra.mxu0 %v925
          %959 = vmatprep.subr.bf16.mxu0 %v928
          %960 = vmatpush1.bf16.msra.mxu0 %v927
          %961 = vmatprep.subr.bf16.mxu0 %v930
          %962 = vmatpush1.bf16.msra.mxu0 %v929
          %963 = vmatprep.subr.bf16.mxu0 %v932
          %964 = vmatpush1.bf16.msra.mxu0 %v931
          %965 = vmatprep.subr.bf16.mxu0 %v934
          %966 = vmatpush1.bf16.msra.mxu0 %v933
          %967 = vmatprep.subr.bf16.mxu0 0
          %968 = vmatpush1.bf16.msra.mxu0 0
          %969 = vmatprep.subr.bf16.mxu0 0
          %970 = vmatpush1.bf16.msra.mxu0 0
          %971 = vmatprep.subr.bf16.mxu0 0
          %972 = vmatpush1.bf16.msra.mxu0 0
          %973 = vmatprep.subr.bf16.mxu0 0
          %974 = vmatpush1.bf16.msra.mxu0 0
          %975 = vmatprep.subr.bf16.mxu0 0
          %976 = vmatpush1.bf16.msra.mxu0 0
          %977 = vmatprep.subr.bf16.mxu0 0
          %978 = vmatpush1.bf16.msra.mxu0 0
          %979 = vmatprep.subr.bf16.mxu0 0
          %980 = vmatpush1.bf16.msra.mxu0 0
          %981 = vmatprep.subr.bf16.mxu0 0
          %982 = vmatpush1.bf16.msra.mxu0 0
          %983 = vmatprep.mubr.bf16.mxu0 0
          %984 = vmatmul.mubr.bf16.gmra.mrb[0].mxu0 %v859
          %v985 = vpop.f32.mrb[0].mxu0
          %v986 = vadd.f32 0.0, %v985
          %v987 = vpop.f32.mrb[0].mxu0
          %v988 = vadd.f32 0.0, %v987
          %v989 = vpop.f32.mrb[0].mxu0
          %v990 = vadd.f32 0.0, %v989
          %v991 = vpop.f32.mrb[0].mxu0
          %v992 = vadd.f32 0.0, %v991
          %993 = vmatprep.mubr.bf16.mxu0 0
          %994 = vmatmul.mubr.bf16.gmra.mrb[0].mxu0 %v860
          %v995 = vpop.f32.mrb[0].mxu0
          %v996 = vadd.f32 0.0, %v995
          %v997 = vpop.f32.mrb[0].mxu0
          %v998 = vadd.f32 0.0, %v997
          %v999 = vpop.f32.mrb[0].mxu0
          %v1000 = vadd.f32 0.0, %v999
          %v1001 = vpop.f32.mrb[0].mxu0
          %v1002 = vadd.f32 0.0, %v1001
          %1003 = vmatprep.mubr.bf16.mxu0 0
          %1004 = vmatmul.mubr.bf16.gmra.mrb[0].mxu0 %v861
          %v1005 = vpop.f32.mrb[0].mxu0
          %v1006 = vadd.f32 0.0, %v1005
          %v1007 = vpop.f32.mrb[0].mxu0
          %v1008 = vadd.f32 0.0, %v1007
          %v1009 = vpop.f32.mrb[0].mxu0
          %v1010 = vadd.f32 0.0, %v1009
          %v1011 = vpop.f32.mrb[0].mxu0
          %v1012 = vadd.f32 0.0, %v1011
          %1013 = vmatprep.mubr.bf16.mxu0 0
          %1014 = vmatmul.mubr.bf16.gmra.mrb[0].mxu0 %v862
          %v1015 = vpop.f32.mrb[0].mxu0
          %v1016 = vadd.f32 0.0, %v1015
          %v1017 = vpop.f32.mrb[0].mxu0
          %v1018 = vadd.f32 0.0, %v1017
          %v1019 = vpop.f32.mrb[0].mxu0
          %v1020 = vadd.f32 0.0, %v1019
          %v1021 = vpop.f32.mrb[0].mxu0
          %v1022 = vadd.f32 0.0, %v1021
          %1023 = vmatprep.mubr.bf16.mxu0 0
          %1024 = vmatmul.mubr.bf16.gmra.mrb[0].mxu0 %v863
          %v1025 = vpop.f32.mrb[0].mxu0
          %v1026 = vadd.f32 0.0, %v1025
          %v1027 = vpop.f32.mrb[0].mxu0
          %v1028 = vadd.f32 0.0, %v1027
          %v1029 = vpop.f32.mrb[0].mxu0
          %v1030 = vadd.f32 0.0, %v1029
          %v1031 = vpop.f32.mrb[0].mxu0
          %v1032 = vadd.f32 0.0, %v1031
          %1033 = vmatprep.mubr.bf16.mxu0 0
          %1034 = vmatmul.mubr.bf16.gmra.mrb[0].mxu0 %v864
          %v1035 = vpop.f32.mrb[0].mxu0
          %v1036 = vadd.f32 0.0, %v1035
          %v1037 = vpop.f32.mrb[0].mxu0
          %v1038 = vadd.f32 0.0, %v1037
          %v1039 = vpop.f32.mrb[0].mxu0
          %v1040 = vadd.f32 0.0, %v1039
          %v1041 = vpop.f32.mrb[0].mxu0
          %v1042 = vadd.f32 0.0, %v1041
          %1043 = vdwg.mxu0
          %v1056 = vunpack.c.l.b16 %v766
          %v1057 = vunpack.c.l.b16 %v767
          %v1058 = vunpack.c.l.b16 %v768
          %v1059 = vunpack.c.l.b16 %v769
          %v1060 = vunpack.c.l.b16 %v770
          %v1061 = vunpack.c.l.b16 %v771
          %v1062 = vunpack.c.l.b16 %v772
          %v1063 = vunpack.c.l.b16 %v773
          %v1064 = vunpack.c.l.b16 %v774
          %v1065 = vunpack.c.l.b16 %v775
          %v1066 = vunpack.c.l.b16 %v776
          %v1067 = vunpack.c.l.b16 %v777
          %v1068 = vpack.c.b16 %v1057, %v1056
          %v1069 = vpack.c.b16 %v1059, %v1058
          %v1070 = vpack.c.b16 %v1061, %v1060
          %v1071 = vpack.c.b16 %v1063, %v1062
          %v1072 = vpack.c.b16 %v1065, %v1064
          %v1073 = vpack.c.b16 %v1067, %v1066
          %v1096 = vunpack.c.l.b16 %v783
          %v1097 = vunpack.c.h.b16 %v783
          %v1098 = vunpack.c.l.b16 %v784
          %v1099 = vunpack.c.h.b16 %v784
          %v1100 = vunpack.c.l.b16 %v785
          %v1101 = vunpack.c.h.b16 %v785
          %v1102 = vunpack.c.l.b16 %v786
          %v1103 = vunpack.c.h.b16 %v786
          %v1104 = vunpack.c.l.b16 %v787
          %v1105 = vunpack.c.h.b16 %v787
          %v1106 = vunpack.c.l.b16 %v788
          %v1107 = vunpack.c.h.b16 %v788
          %v1108 = vunpack.c.l.b16 %v789
          %v1109 = vunpack.c.h.b16 %v789
          %v1110 = vunpack.c.l.b16 %v790
          %v1111 = vunpack.c.h.b16 %v790
          %v1112 = vunpack.c.l.b16 %v791
          %v1113 = vunpack.c.h.b16 %v791
          %v1114 = vunpack.c.l.b16 %v792
          %v1115 = vunpack.c.h.b16 %v792
          %v1116 = vunpack.c.l.b16 %v793
          %v1117 = vunpack.c.h.b16 %v793
          %v1118 = vunpack.c.l.b16 %v794
          %v1119 = vunpack.c.h.b16 %v794
          %v1120 = vunpack.c.l.b16 %v795
          %v1121 = vunpack.c.h.b16 %v795
          %v1122 = vunpack.c.l.b16 %v796
          %v1123 = vunpack.c.h.b16 %v796
          %v1124 = vunpack.c.l.b16 %v797
          %v1125 = vunpack.c.h.b16 %v797
          %v1126 = vunpack.c.l.b16 %v798
          %v1127 = vunpack.c.h.b16 %v798
          %v1128 = vpack.c.b16 %v1098, %v1096
          %v1129 = vpack.c.b16 %v1099, %v1097
          %v1130 = vpack.c.b16 %v1102, %v1100
          %v1131 = vpack.c.b16 %v1103, %v1101
          %v1132 = vpack.c.b16 %v1106, %v1104
          %v1133 = vpack.c.b16 %v1107, %v1105
          %v1134 = vpack.c.b16 %v1110, %v1108
          %v1135 = vpack.c.b16 %v1111, %v1109
          %v1136 = vpack.c.b16 %v1114, %v1112
          %v1137 = vpack.c.b16 %v1115, %v1113
          %v1138 = vpack.c.b16 %v1118, %v1116
          %v1139 = vpack.c.b16 %v1119, %v1117
          %v1140 = vpack.c.b16 %v1122, %v1120
          %v1141 = vpack.c.b16 %v1123, %v1121
          %v1142 = vpack.c.b16 %v1126, %v1124
          %v1143 = vpack.c.b16 %v1127, %v1125
          %1160 = vmatprep.subr.bf16.mxu0 %v1129
          %1161 = vmatpush1.bf16.msra.mxu0 %v1128
          %1162 = vmatprep.subr.bf16.mxu0 %v1131
          %1163 = vmatpush1.bf16.msra.mxu0 %v1130
          %1164 = vmatprep.subr.bf16.mxu0 %v1133
          %1165 = vmatpush1.bf16.msra.mxu0 %v1132
          %1166 = vmatprep.subr.bf16.mxu0 %v1135
          %1167 = vmatpush1.bf16.msra.mxu0 %v1134
          %1168 = vmatprep.subr.bf16.mxu0 %v1137
          %1169 = vmatpush1.bf16.msra.mxu0 %v1136
          %1170 = vmatprep.subr.bf16.mxu0 %v1139
          %1171 = vmatpush1.bf16.msra.mxu0 %v1138
          %1172 = vmatprep.subr.bf16.mxu0 %v1141
          %1173 = vmatpush1.bf16.msra.mxu0 %v1140
          %1174 = vmatprep.subr.bf16.mxu0 %v1143
          %1175 = vmatpush1.bf16.msra.mxu0 %v1142
          %1176 = vmatprep.subr.bf16.mxu0 0
          %1177 = vmatpush1.bf16.msra.mxu0 0
          %1178 = vmatprep.subr.bf16.mxu0 0
          %1179 = vmatpush1.bf16.msra.mxu0 0
          %1180 = vmatprep.subr.bf16.mxu0 0
          %1181 = vmatpush1.bf16.msra.mxu0 0
          %1182 = vmatprep.subr.bf16.mxu0 0
          %1183 = vmatpush1.bf16.msra.mxu0 0
          %1184 = vmatprep.subr.bf16.mxu0 0
          %1185 = vmatpush1.bf16.msra.mxu0 0
          %1186 = vmatprep.subr.bf16.mxu0 0
          %1187 = vmatpush1.bf16.msra.mxu0 0
          %1188 = vmatprep.subr.bf16.mxu0 0
          %1189 = vmatpush1.bf16.msra.mxu0 0
          %1190 = vmatprep.subr.bf16.mxu0 0
          %1191 = vmatpush1.bf16.msra.mxu0 0
          %1192 = vmatprep.mubr.bf16.mxu0 0
          %1193 = vmatmul.mubr.bf16.gmra.mrb[0].mxu0 %v1068
          %v1194 = vpop.f32.mrb[0].mxu0
          %v1195 = vadd.f32 %v986, %v1194
          %v1196 = vpop.f32.mrb[0].mxu0
          %v1197 = vadd.f32 %v988, %v1196
          %v1198 = vpop.f32.mrb[0].mxu0
          %v1199 = vadd.f32 %v990, %v1198
          %v1200 = vpop.f32.mrb[0].mxu0
          %v1201 = vadd.f32 %v992, %v1200
          %1202 = vmatprep.mubr.bf16.mxu0 0
          %1203 = vmatmul.mubr.bf16.gmra.mrb[0].mxu0 %v1069
          %v1204 = vpop.f32.mrb[0].mxu0
          %v1205 = vadd.f32 %v996, %v1204
          %v1206 = vpop.f32.mrb[0].mxu0
          %v1207 = vadd.f32 %v998, %v1206
          %v1208 = vpop.f32.mrb[0].mxu0
          %v1209 = vadd.f32 %v1000, %v1208
          %v1210 = vpop.f32.mrb[0].mxu0
          %v1211 = vadd.f32 %v1002, %v1210
          %1212 = vmatprep.mubr.bf16.mxu0 0
          %1213 = vmatmul.mubr.bf16.gmra.mrb[0].mxu0 %v1070
          %v1214 = vpop.f32.mrb[0].mxu0
          %v1215 = vadd.f32 %v1006, %v1214
          %v1216 = vpop.f32.mrb[0].mxu0
          %v1217 = vadd.f32 %v1008, %v1216
          %v1218 = vpop.f32.mrb[0].mxu0
          %v1219 = vadd.f32 %v1010, %v1218
          %v1220 = vpop.f32.mrb[0].mxu0
          %v1221 = vadd.f32 %v1012, %v1220
          %1222 = vmatprep.mubr.bf16.mxu0 0
          %1223 = vmatmul.mubr.bf16.gmra.mrb[0].mxu0 %v1071
          %v1224 = vpop.f32.mrb[0].mxu0
          %v1225 = vadd.f32 %v1016, %v1224
          %v1226 = vpop.f32.mrb[0].mxu0
          %v1227 = vadd.f32 %v1018, %v1226
          %v1228 = vpop.f32.mrb[0].mxu0
          %v1229 = vadd.f32 %v1020, %v1228
          %v1230 = vpop.f32.mrb[0].mxu0
          %v1231 = vadd.f32 %v1022, %v1230
          %1232 = vmatprep.mubr.bf16.mxu0 0
          %1233 = vmatmul.mubr.bf16.gmra.mrb[0].mxu0 %v1072
          %v1234 = vpop.f32.mrb[0].mxu0
          %v1235 = vadd.f32 %v1026, %v1234
          %v1236 = vpop.f32.mrb[0].mxu0
          %v1237 = vadd.f32 %v1028, %v1236
          %v1238 = vpop.f32.mrb[0].mxu0
          %v1239 = vadd.f32 %v1030, %v1238
          %v1240 = vpop.f32.mrb[0].mxu0
          %v1241 = vadd.f32 %v1032, %v1240
          %1242 = vmatprep.mubr.bf16.mxu0 0
          %1243 = vmatmul.mubr.bf16.gmra.mrb[0].mxu0 %v1073
          %v1244 = vpop.f32.mrb[0].mxu0
          %v1245 = vadd.f32 %v1036, %v1244
          %v1246 = vpop.f32.mrb[0].mxu0
          %v1247 = vadd.f32 %v1038, %v1246
          %v1248 = vpop.f32.mrb[0].mxu0
          %v1249 = vadd.f32 %v1040, %v1248
          %v1250 = vpop.f32.mrb[0].mxu0
          %v1251 = vadd.f32 %v1042, %v1250
          %1252 = vdwg.mxu0
          %s1253 = sadd.s32 %s761, 192
          %s1254 = sshra.s32 %s1253, 3
          %s1255 = sand.u32 %s1253, 7
          %s1256 = smul.addr %s1254, 4
          %s1257 = scalar_lea.vmem %s589, %s1256 [#allocation2]
          %v1258 = vld [vmem:[%s1257] sm:$0xf]
          %v1259 = vld [vmem:[%s1257 + $0x4] sm:$0xf]
          %v1260 = vld [vmem:[%s1257 + $0x8] sm:$0xf]
          %v1261 = vld [vmem:[%s1257 + $0xc] sm:$0xf]
          %v1262 = vld [vmem:[%s1257 + $0x10] sm:$0xf]
          %v1263 = vld [vmem:[%s1257 + $0x14] sm:$0xf]
          %v1264 = vld [vmem:[%s1257 + $0x18] sm:$0xf]
          %v1265 = vld [vmem:[%s1257 + $0x1c] sm:$0xf]
          %v1266 = vld [vmem:[%s1257 + $0x20] sm:$0xf]
          %v1267 = vld [vmem:[%s1257 + $0x24] sm:$0xf]
          %v1268 = vld [vmem:[%s1257 + $0x28] sm:$0xf]
          %v1269 = vld [vmem:[%s1257 + $0x2c] sm:$0xf]
          %s1270 = sadd.s32 %s780, 192
          %s1271 = smul.addr %s1270, 4
          %s1272 = scalar_lea.vmem %s1, %s1271
          %v1273 = vld [vmem:[%s1272] sm:$0xff]
          %v1274 = vld [vmem:[%s1272 + $0x8] sm:$0xff]
          %v1275 = vld [vmem:[%s1272 + $0x10] sm:$0xff]
          %v1276 = vld [vmem:[%s1272 + $0x18] sm:$0xff]
          %v1277 = vld [vmem:[%s1272 + $0x20] sm:$0xff]
          %v1278 = vld [vmem:[%s1272 + $0x28] sm:$0xff]
          %v1279 = vld [vmem:[%s1272 + $0x30] sm:$0xff]
          %v1280 = vld [vmem:[%s1272 + $0x38] sm:$0xff]
          %v1281 = vld [vmem:[%s1272 + $0x40] sm:$0xff]
          %v1282 = vld [vmem:[%s1272 + $0x48] sm:$0xff]
          %v1283 = vld [vmem:[%s1272 + $0x50] sm:$0xff]
          %v1284 = vld [vmem:[%s1272 + $0x58] sm:$0xff]
          %v1285 = vld [vmem:[%s1272 + $0x60] sm:$0xff]
          %v1286 = vld [vmem:[%s1272 + $0x68] sm:$0xff]
          %v1287 = vld [vmem:[%s1272 + $0x70] sm:$0xff]
          %v1288 = vld [vmem:[%s1272 + $0x78] sm:$0xff]
          %v1301 = vunpack.c.l.b16 %v1258
          %v1302 = vunpack.c.l.b16 %v1259
          %v1303 = vunpack.c.l.b16 %v1260
          %v1304 = vunpack.c.l.b16 %v1261
          %v1305 = vunpack.c.l.b16 %v1262
          %v1306 = vunpack.c.l.b16 %v1263
          %v1307 = vunpack.c.l.b16 %v1264
          %v1308 = vunpack.c.l.b16 %v1265
          %v1309 = vunpack.c.l.b16 %v1266
          %v1310 = vunpack.c.l.b16 %v1267
          %v1311 = vunpack.c.l.b16 %v1268
          %v1312 = vunpack.c.l.b16 %v1269
          %v1313 = vpack.c.b16 %v1302, %v1301
          %v1314 = vpack.c.b16 %v1304, %v1303
          %v1315 = vpack.c.b16 %v1306, %v1305
          %v1316 = vpack.c.b16 %v1308, %v1307
          %v1317 = vpack.c.b16 %v1310, %v1309
          %v1318 = vpack.c.b16 %v1312, %v1311
          %v1341 = vunpack.c.l.b16 %v1273
          %v1342 = vunpack.c.h.b16 %v1273
          %v1343 = vunpack.c.l.b16 %v1274
          %v1344 = vunpack.c.h.b16 %v1274
          %v1345 = vunpack.c.l.b16 %v1275
          %v1346 = vunpack.c.h.b16 %v1275
          %v1347 = vunpack.c.l.b16 %v1276
          %v1348 = vunpack.c.h.b16 %v1276
          %v1349 = vunpack.c.l.b16 %v1277
          %v1350 = vunpack.c.h.b16 %v1277
          %v1351 = vunpack.c.l.b16 %v1278
          %v1352 = vunpack.c.h.b16 %v1278
          %v1353 = vunpack.c.l.b16 %v1279
          %v1354 = vunpack.c.h.b16 %v1279
          %v1355 = vunpack.c.l.b16 %v1280
          %v1356 = vunpack.c.h.b16 %v1280
          %v1357 = vunpack.c.l.b16 %v1281
          %v1358 = vunpack.c.h.b16 %v1281
          %v1359 = vunpack.c.l.b16 %v1282
          %v1360 = vunpack.c.h.b16 %v1282
          %v1361 = vunpack.c.l.b16 %v1283
          %v1362 = vunpack.c.h.b16 %v1283
          %v1363 = vunpack.c.l.b16 %v1284
          %v1364 = vunpack.c.h.b16 %v1284
          %v1365 = vunpack.c.l.b16 %v1285
          %v1366 = vunpack.c.h.b16 %v1285
          %v1367 = vunpack.c.l.b16 %v1286
          %v1368 = vunpack.c.h.b16 %v1286
          %v1369 = vunpack.c.l.b16 %v1287
          %v1370 = vunpack.c.h.b16 %v1287
          %v1371 = vunpack.c.l.b16 %v1288
          %v1372 = vunpack.c.h.b16 %v1288
          %v1373 = vpack.c.b16 %v1343, %v1341
          %v1374 = vpack.c.b16 %v1344, %v1342
          %v1375 = vpack.c.b16 %v1347, %v1345
          %v1376 = vpack.c.b16 %v1348, %v1346
          %v1377 = vpack.c.b16 %v1351, %v1349
          %v1378 = vpack.c.b16 %v1352, %v1350
          %v1379 = vpack.c.b16 %v1355, %v1353
          %v1380 = vpack.c.b16 %v1356, %v1354
          %v1381 = vpack.c.b16 %v1359, %v1357
          %v1382 = vpack.c.b16 %v1360, %v1358
          %v1383 = vpack.c.b16 %v1363, %v1361
          %v1384 = vpack.c.b16 %v1364, %v1362
          %v1385 = vpack.c.b16 %v1367, %v1365
          %v1386 = vpack.c.b16 %v1368, %v1366
          %v1387 = vpack.c.b16 %v1371, %v1369
          %v1388 = vpack.c.b16 %v1372, %v1370
          %1405 = vmatprep.subr.bf16.mxu0 %v1374
          %1406 = vmatpush1.bf16.msra.mxu0 %v1373
          %1407 = vmatprep.subr.bf16.mxu0 %v1376
          %1408 = vmatpush1.bf16.msra.mxu0 %v1375
          %1409 = vmatprep.subr.bf16.mxu0 %v1378
          %1410 = vmatpush1.bf16.msra.mxu0 %v1377
          %1411 = vmatprep.subr.bf16.mxu0 %v1380
          %1412 = vmatpush1.bf16.msra.mxu0 %v1379
          %1413 = vmatprep.subr.bf16.mxu0 %v1382
          %1414 = vmatpush1.bf16.msra.mxu0 %v1381
          %1415 = vmatprep.subr.bf16.mxu0 %v1384
          %1416 = vmatpush1.bf16.msra.mxu0 %v1383
          %1417 = vmatprep.subr.bf16.mxu0 %v1386
          %1418 = vmatpush1.bf16.msra.mxu0 %v1385
          %1419 = vmatprep.subr.bf16.mxu0 %v1388
          %1420 = vmatpush1.bf16.msra.mxu0 %v1387
          %1421 = vmatprep.subr.bf16.mxu0 0
          %1422 = vmatpush1.bf16.msra.mxu0 0
          %1423 = vmatprep.subr.bf16.mxu0 0
          %1424 = vmatpush1.bf16.msra.mxu0 0
          %1425 = vmatprep.subr.bf16.mxu0 0
          %1426 = vmatpush1.bf16.msra.mxu0 0
          %1427 = vmatprep.subr.bf16.mxu0 0
          %1428 = vmatpush1.bf16.msra.mxu0 0
          %1429 = vmatprep.subr.bf16.mxu0 0
          %1430 = vmatpush1.bf16.msra.mxu0 0
          %1431 = vmatprep.subr.bf16.mxu0 0
          %1432 = vmatpush1.bf16.msra.mxu0 0
          %1433 = vmatprep.subr.bf16.mxu0 0
          %1434 = vmatpush1.bf16.msra.mxu0 0
          %1435 = vmatprep.subr.bf16.mxu0 0
          %1436 = vmatpush1.bf16.msra.mxu0 0
          %1437 = vmatprep.mubr.bf16.mxu0 0
          %1438 = vmatmul.mubr.bf16.gmra.mrb[0].mxu0 %v1313
          %v1439 = vpop.f32.mrb[0].mxu0
          %v1440 = vadd.f32 0.0, %v1439
          %v1441 = vpop.f32.mrb[0].mxu0
          %v1442 = vadd.f32 0.0, %v1441
          %v1443 = vpop.f32.mrb[0].mxu0
          %v1444 = vadd.f32 0.0, %v1443
          %v1445 = vpop.f32.mrb[0].mxu0
          %v1446 = vadd.f32 0.0, %v1445
          %1447 = vmatprep.mubr.bf16.mxu0 0
          %1448 = vmatmul.mubr.bf16.gmra.mrb[0].mxu0 %v1314
          %v1449 = vpop.f32.mrb[0].mxu0
          %v1450 = vadd.f32 0.0, %v1449
          %v1451 = vpop.f32.mrb[0].mxu0
          %v1452 = vadd.f32 0.0, %v1451
          %v1453 = vpop.f32.mrb[0].mxu0
          %v1454 = vadd.f32 0.0, %v1453
          %v1455 = vpop.f32.mrb[0].mxu0
          %v1456 = vadd.f32 0.0, %v1455
          %1457 = vmatprep.mubr.bf16.mxu0 0
          %1458 = vmatmul.mubr.bf16.gmra.mrb[0].mxu0 %v1315
          %v1459 = vpop.f32.mrb[0].mxu0
          %v1460 = vadd.f32 0.0, %v1459
          %v1461 = vpop.f32.mrb[0].mxu0
          %v1462 = vadd.f32 0.0, %v1461
          %v1463 = vpop.f32.mrb[0].mxu0
          %v1464 = vadd.f32 0.0, %v1463
          %v1465 = vpop.f32.mrb[0].mxu0
          %v1466 = vadd.f32 0.0, %v1465
          %1467 = vmatprep.mubr.bf16.mxu0 0
          %1468 = vmatmul.mubr.bf16.gmra.mrb[0].mxu0 %v1316
          %v1469 = vpop.f32.mrb[0].mxu0
          %v1470 = vadd.f32 0.0, %v1469
          %v1471 = vpop.f32.mrb[0].mxu0
          %v1472 = vadd.f32 0.0, %v1471
          %v1473 = vpop.f32.mrb[0].mxu0
          %v1474 = vadd.f32 0.0, %v1473
          %v1475 = vpop.f32.mrb[0].mxu0
          %v1476 = vadd.f32 0.0, %v1475
          %1477 = vmatprep.mubr.bf16.mxu0 0
          %1478 = vmatmul.mubr.bf16.gmra.mrb[0].mxu0 %v1317
          %v1479 = vpop.f32.mrb[0].mxu0
          %v1480 = vadd.f32 0.0, %v1479
          %v1481 = vpop.f32.mrb[0].mxu0
          %v1482 = vadd.f32 0.0, %v1481
          %v1483 = vpop.f32.mrb[0].mxu0
          %v1484 = vadd.f32 0.0, %v1483
          %v1485 = vpop.f32.mrb[0].mxu0
          %v1486 = vadd.f32 0.0, %v1485
          %1487 = vmatprep.mubr.bf16.mxu0 0
          %1488 = vmatmul.mubr.bf16.gmra.mrb[0].mxu0 %v1318
          %v1489 = vpop.f32.mrb[0].mxu0
          %v1490 = vadd.f32 0.0, %v1489
          %v1491 = vpop.f32.mrb[0].mxu0
          %v1492 = vadd.f32 0.0, %v1491
          %v1493 = vpop.f32.mrb[0].mxu0
          %v1494 = vadd.f32 0.0, %v1493
          %v1495 = vpop.f32.mrb[0].mxu0
          %v1496 = vadd.f32 0.0, %v1495
          %1497 = vdwg.mxu0
          %v1498 = vadd.f32 %v1195, %v1440
          %v1499 = vadd.f32 %v1197, %v1442
          %v1500 = vadd.f32 %v1199, %v1444
          %v1501 = vadd.f32 %v1201, %v1446
          %v1502 = vadd.f32 %v1205, %v1450
          %v1503 = vadd.f32 %v1207, %v1452
          %v1504 = vadd.f32 %v1209, %v1454
          %v1505 = vadd.f32 %v1211, %v1456
          %v1506 = vadd.f32 %v1215, %v1460
          %v1507 = vadd.f32 %v1217, %v1462
          %v1508 = vadd.f32 %v1219, %v1464
          %v1509 = vadd.f32 %v1221, %v1466
          %v1510 = vadd.f32 %v1225, %v1470
          %v1511 = vadd.f32 %v1227, %v1472
          %v1512 = vadd.f32 %v1229, %v1474
          %v1513 = vadd.f32 %v1231, %v1476
          %v1514 = vadd.f32 %v1235, %v1480
          %v1515 = vadd.f32 %v1237, %v1482
          %v1516 = vadd.f32 %v1239, %v1484
          %v1517 = vadd.f32 %v1241, %v1486
          %v1518 = vadd.f32 %v1245, %v1490
          %v1519 = vadd.f32 %v1247, %v1492
          %v1520 = vadd.f32 %v1249, %v1494
          %v1521 = vadd.f32 %v1251, %v1496
          %s1522 = sadd.s32 %s761, 288
          %s1523 = sshra.s32 %s1522, 3
          %s1524 = sand.u32 %s1522, 7
          %s1525 = smul.addr %s1523, 4
          %s1526 = scalar_lea.vmem %s589, %s1525 [#allocation2]
          %v1527 = vld [vmem:[%s1526] sm:$0xf]
          %v1528 = vld [vmem:[%s1526 + $0x4] sm:$0xf]
          %v1529 = vld [vmem:[%s1526 + $0x8] sm:$0xf]
          %v1530 = vld [vmem:[%s1526 + $0xc] sm:$0xf]
          %v1531 = vld [vmem:[%s1526 + $0x10] sm:$0xf]
          %v1532 = vld [vmem:[%s1526 + $0x14] sm:$0xf]
          %v1533 = vld [vmem:[%s1526 + $0x18] sm:$0xf]
          %v1534 = vld [vmem:[%s1526 + $0x1c] sm:$0xf]
          %v1535 = vld [vmem:[%s1526 + $0x20] sm:$0xf]
          %v1536 = vld [vmem:[%s1526 + $0x24] sm:$0xf]
          %v1537 = vld [vmem:[%s1526 + $0x28] sm:$0xf]
          %v1538 = vld [vmem:[%s1526 + $0x2c] sm:$0xf]
          %s1539 = sadd.s32 %s780, 288
          %s1540 = smul.addr %s1539, 4
          %s1541 = scalar_lea.vmem %s1, %s1540
          %v1542 = vld [vmem:[%s1541] sm:$0xff]
          %v1543 = vld [vmem:[%s1541 + $0x8] sm:$0xff]
          %v1544 = vld [vmem:[%s1541 + $0x10] sm:$0xff]
          %v1545 = vld [vmem:[%s1541 + $0x18] sm:$0xff]
          %v1546 = vld [vmem:[%s1541 + $0x20] sm:$0xff]
          %v1547 = vld [vmem:[%s1541 + $0x28] sm:$0xff]
          %v1548 = vld [vmem:[%s1541 + $0x30] sm:$0xff]
          %v1549 = vld [vmem:[%s1541 + $0x38] sm:$0xff]
          %v1550 = vld [vmem:[%s1541 + $0x40] sm:$0xff]
          %v1551 = vld [vmem:[%s1541 + $0x48] sm:$0xff]
          %v1552 = vld [vmem:[%s1541 + $0x50] sm:$0xff]
          %v1553 = vld [vmem:[%s1541 + $0x58] sm:$0xff]
          %v1554 = vld [vmem:[%s1541 + $0x60] sm:$0xff]
          %v1555 = vld [vmem:[%s1541 + $0x68] sm:$0xff]
          %v1556 = vld [vmem:[%s1541 + $0x70] sm:$0xff]
          %v1557 = vld [vmem:[%s1541 + $0x78] sm:$0xff]
          %v1570 = vunpack.c.l.b16 %v1527
          %v1571 = vunpack.c.l.b16 %v1528
          %v1572 = vunpack.c.l.b16 %v1529
          %v1573 = vunpack.c.l.b16 %v1530
          %v1574 = vunpack.c.l.b16 %v1531
          %v1575 = vunpack.c.l.b16 %v1532
          %v1576 = vunpack.c.l.b16 %v1533
          %v1577 = vunpack.c.l.b16 %v1534
          %v1578 = vunpack.c.l.b16 %v1535
          %v1579 = vunpack.c.l.b16 %v1536
          %v1580 = vunpack.c.l.b16 %v1537
          %v1581 = vunpack.c.l.b16 %v1538
          %v1582 = vpack.c.b16 %v1571, %v1570
          %v1583 = vpack.c.b16 %v1573, %v1572
          %v1584 = vpack.c.b16 %v1575, %v1574
          %v1585 = vpack.c.b16 %v1577, %v1576
          %v1586 = vpack.c.b16 %v1579, %v1578
          %v1587 = vpack.c.b16 %v1581, %v1580
          %v1610 = vunpack.c.l.b16 %v1542
          %v1611 = vunpack.c.h.b16 %v1542
          %v1612 = vunpack.c.l.b16 %v1543
          %v1613 = vunpack.c.h.b16 %v1543
          %v1614 = vunpack.c.l.b16 %v1544
          %v1615 = vunpack.c.h.b16 %v1544
          %v1616 = vunpack.c.l.b16 %v1545
          %v1617 = vunpack.c.h.b16 %v1545
          %v1618 = vunpack.c.l.b16 %v1546
          %v1619 = vunpack.c.h.b16 %v1546
          %v1620 = vunpack.c.l.b16 %v1547
          %v1621 = vunpack.c.h.b16 %v1547
          %v1622 = vunpack.c.l.b16 %v1548
          %v1623 = vunpack.c.h.b16 %v1548
          %v1624 = vunpack.c.l.b16 %v1549
          %v1625 = vunpack.c.h.b16 %v1549
          %v1626 = vunpack.c.l.b16 %v1550
          %v1627 = vunpack.c.h.b16 %v1550
          %v1628 = vunpack.c.l.b16 %v1551
          %v1629 = vunpack.c.h.b16 %v1551
          %v1630 = vunpack.c.l.b16 %v1552
          %v1631 = vunpack.c.h.b16 %v1552
          %v1632 = vunpack.c.l.b16 %v1553
          %v1633 = vunpack.c.h.b16 %v1553
          %v1634 = vunpack.c.l.b16 %v1554
          %v1635 = vunpack.c.h.b16 %v1554
          %v1636 = vunpack.c.l.b16 %v1555
          %v1637 = vunpack.c.h.b16 %v1555
          %v1638 = vunpack.c.l.b16 %v1556
          %v1639 = vunpack.c.h.b16 %v1556
          %v1640 = vunpack.c.l.b16 %v1557
          %v1641 = vunpack.c.h.b16 %v1557
          %v1642 = vpack.c.b16 %v1612, %v1610
          %v1643 = vpack.c.b16 %v1613, %v1611
          %v1644 = vpack.c.b16 %v1616, %v1614
          %v1645 = vpack.c.b16 %v1617, %v1615
          %v1646 = vpack.c.b16 %v1620, %v1618
          %v1647 = vpack.c.b16 %v1621, %v1619
          %v1648 = vpack.c.b16 %v1624, %v1622
          %v1649 = vpack.c.b16 %v1625, %v1623
          %v1650 = vpack.c.b16 %v1628, %v1626
          %v1651 = vpack.c.b16 %v1629, %v1627
          %v1652 = vpack.c.b16 %v1632, %v1630
          %v1653 = vpack.c.b16 %v1633, %v1631
          %v1654 = vpack.c.b16 %v1636, %v1634
          %v1655 = vpack.c.b16 %v1637, %v1635
          %v1656 = vpack.c.b16 %v1640, %v1638
          %v1657 = vpack.c.b16 %v1641, %v1639
          %1674 = vmatprep.subr.bf16.mxu0 %v1643
          %1675 = vmatpush1.bf16.msra.mxu0 %v1642
          %1676 = vmatprep.subr.bf16.mxu0 %v1645
          %1677 = vmatpush1.bf16.msra.mxu0 %v1644
          %1678 = vmatprep.subr.bf16.mxu0 %v1647
          %1679 = vmatpush1.bf16.msra.mxu0 %v1646
          %1680 = vmatprep.subr.bf16.mxu0 %v1649
          %1681 = vmatpush1.bf16.msra.mxu0 %v1648
          %1682 = vmatprep.subr.bf16.mxu0 %v1651
          %1683 = vmatpush1.bf16.msra.mxu0 %v1650
          %1684 = vmatprep.subr.bf16.mxu0 %v1653
          %1685 = vmatpush1.bf16.msra.mxu0 %v1652
          %1686 = vmatprep.subr.bf16.mxu0 %v1655
          %1687 = vmatpush1.bf16.msra.mxu0 %v1654
          %1688 = vmatprep.subr.bf16.mxu0 %v1657
          %1689 = vmatpush1.bf16.msra.mxu0 %v1656
          %1690 = vmatprep.subr.bf16.mxu0 0
          %1691 = vmatpush1.bf16.msra.mxu0 0
          %1692 = vmatprep.subr.bf16.mxu0 0
          %1693 = vmatpush1.bf16.msra.mxu0 0
          %1694 = vmatprep.subr.bf16.mxu0 0
          %1695 = vmatpush1.bf16.msra.mxu0 0
          %1696 = vmatprep.subr.bf16.mxu0 0
          %1697 = vmatpush1.bf16.msra.mxu0 0
          %1698 = vmatprep.subr.bf16.mxu0 0
          %1699 = vmatpush1.bf16.msra.mxu0 0
          %1700 = vmatprep.subr.bf16.mxu0 0
          %1701 = vmatpush1.bf16.msra.mxu0 0
          %1702 = vmatprep.subr.bf16.mxu0 0
          %1703 = vmatpush1.bf16.msra.mxu0 0
          %1704 = vmatprep.subr.bf16.mxu0 0
          %1705 = vmatpush1.bf16.msra.mxu0 0
          %1706 = vmatprep.mubr.bf16.mxu0 0
          %1707 = vmatmul.mubr.bf16.gmra.mrb[0].mxu0 %v1582
          %v1708 = vpop.f32.mrb[0].mxu0
          %v1709 = vadd.f32 0.0, %v1708
          %v1710 = vpop.f32.mrb[0].mxu0
          %v1711 = vadd.f32 0.0, %v1710
          %v1712 = vpop.f32.mrb[0].mxu0
          %v1713 = vadd.f32 0.0, %v1712
          %v1714 = vpop.f32.mrb[0].mxu0
          %v1715 = vadd.f32 0.0, %v1714
          %1716 = vmatprep.mubr.bf16.mxu0 0
          %1717 = vmatmul.mubr.bf16.gmra.mrb[0].mxu0 %v1583
          %v1718 = vpop.f32.mrb[0].mxu0
          %v1719 = vadd.f32 0.0, %v1718
          %v1720 = vpop.f32.mrb[0].mxu0
          %v1721 = vadd.f32 0.0, %v1720
          %v1722 = vpop.f32.mrb[0].mxu0
          %v1723 = vadd.f32 0.0, %v1722
          %v1724 = vpop.f32.mrb[0].mxu0
          %v1725 = vadd.f32 0.0, %v1724
          %1726 = vmatprep.mubr.bf16.mxu0 0
          %1727 = vmatmul.mubr.bf16.gmra.mrb[0].mxu0 %v1584
          %v1728 = vpop.f32.mrb[0].mxu0
          %v1729 = vadd.f32 0.0, %v1728
          %v1730 = vpop.f32.mrb[0].mxu0
          %v1731 = vadd.f32 0.0, %v1730
          %v1732 = vpop.f32.mrb[0].mxu0
          %v1733 = vadd.f32 0.0, %v1732
          %v1734 = vpop.f32.mrb[0].mxu0
          %v1735 = vadd.f32 0.0, %v1734
          %1736 = vmatprep.mubr.bf16.mxu0 0
          %1737 = vmatmul.mubr.bf16.gmra.mrb[0].mxu0 %v1585
          %v1738 = vpop.f32.mrb[0].mxu0
          %v1739 = vadd.f32 0.0, %v1738
          %v1740 = vpop.f32.mrb[0].mxu0
          %v1741 = vadd.f32 0.0, %v1740
          %v1742 = vpop.f32.mrb[0].mxu0
          %v1743 = vadd.f32 0.0, %v1742
          %v1744 = vpop.f32.mrb[0].mxu0
          %v1745 = vadd.f32 0.0, %v1744
          %1746 = vmatprep.mubr.bf16.mxu0 0
          %1747 = vmatmul.mubr.bf16.gmra.mrb[0].mxu0 %v1586
          %v1748 = vpop.f32.mrb[0].mxu0
          %v1749 = vadd.f32 0.0, %v1748
          %v1750 = vpop.f32.mrb[0].mxu0
          %v1751 = vadd.f32 0.0, %v1750
          %v1752 = vpop.f32.mrb[0].mxu0
          %v1753 = vadd.f32 0.0, %v1752
          %v1754 = vpop.f32.mrb[0].mxu0
          %v1755 = vadd.f32 0.0, %v1754
          %1756 = vmatprep.mubr.bf16.mxu0 0
          %1757 = vmatmul.mubr.bf16.gmra.mrb[0].mxu0 %v1587
          %v1758 = vpop.f32.mrb[0].mxu0
          %v1759 = vadd.f32 0.0, %v1758
          %v1760 = vpop.f32.mrb[0].mxu0
          %v1761 = vadd.f32 0.0, %v1760
          %v1762 = vpop.f32.mrb[0].mxu0
          %v1763 = vadd.f32 0.0, %v1762
          %v1764 = vpop.f32.mrb[0].mxu0
          %v1765 = vadd.f32 0.0, %v1764
          %1766 = vdwg.mxu0
          %v1767 = vadd.f32 %v1498, %v1709
          %v1768 = vadd.f32 %v1499, %v1711
          %v1769 = vadd.f32 %v1500, %v1713
          %v1770 = vadd.f32 %v1501, %v1715
          %v1771 = vadd.f32 %v1502, %v1719
          %v1772 = vadd.f32 %v1503, %v1721
          %v1773 = vadd.f32 %v1504, %v1723
          %v1774 = vadd.f32 %v1505, %v1725
          %v1775 = vadd.f32 %v1506, %v1729
          %v1776 = vadd.f32 %v1507, %v1731
          %v1777 = vadd.f32 %v1508, %v1733
          %v1778 = vadd.f32 %v1509, %v1735
          %v1779 = vadd.f32 %v1510, %v1739
          %v1780 = vadd.f32 %v1511, %v1741
          %v1781 = vadd.f32 %v1512, %v1743
          %v1782 = vadd.f32 %v1513, %v1745
          %v1783 = vadd.f32 %v1514, %v1749
          %v1784 = vadd.f32 %v1515, %v1751
          %v1785 = vadd.f32 %v1516, %v1753
          %v1786 = vadd.f32 %v1517, %v1755
          %v1787 = vadd.f32 %v1518, %v1759
          %v1788 = vadd.f32 %v1519, %v1761
          %v1789 = vadd.f32 %v1520, %v1763
          %v1790 = vadd.f32 %v1521, %v1765
          %s1791 = sshra.s32 %s761, 3
          %s1792 = sand.u32 %s761, 7
          %s1793 = smul.u32 %s1791, 2
          %s1794 = smul.addr %s1793, 8
          %s1795 = scalar_lea.vmem %s612, %s1794
          %v1796 = vld [vmem:[%s1795] sm:$0xff]
          %v1797 = vld [vmem:[%s1795 + $0x8] sm:$0xff]
          %v1798 = vld [vmem:[%s1795 + $0x10] sm:$0xff]
          %v1799 = vld [vmem:[%s1795 + $0x18] sm:$0xff]
          %v1800 = vld [vmem:[%s1795 + $0x20] sm:$0xff]
          %v1801 = vld [vmem:[%s1795 + $0x28] sm:$0xff]
          %v1802 = vld [vmem:[%s1795 + $0x30] sm:$0xff]
          %v1803 = vld [vmem:[%s1795 + $0x38] sm:$0xff]
          %v1804 = vld [vmem:[%s1795 + $0x40] sm:$0xff]
          %v1805 = vld [vmem:[%s1795 + $0x48] sm:$0xff]
          %v1806 = vld [vmem:[%s1795 + $0x50] sm:$0xff]
          %v1807 = vld [vmem:[%s1795 + $0x58] sm:$0xff]
          %v1808 = vld [vmem:[%s1795 + $0x60] sm:$0xff]
          %v1809 = vld [vmem:[%s1795 + $0x68] sm:$0xff]
          %v1810 = vld [vmem:[%s1795 + $0x70] sm:$0xff]
          %v1811 = vld [vmem:[%s1795 + $0x78] sm:$0xff]
          %v1812 = vld [vmem:[%s1795 + $0x80] sm:$0xff]
          %v1813 = vld [vmem:[%s1795 + $0x88] sm:$0xff]
          %v1814 = vld [vmem:[%s1795 + $0x90] sm:$0xff]
          %v1815 = vld [vmem:[%s1795 + $0x98] sm:$0xff]
          %v1816 = vld [vmem:[%s1795 + $0xa0] sm:$0xff]
          %v1817 = vld [vmem:[%s1795 + $0xa8] sm:$0xff]
          %v1818 = vld [vmem:[%s1795 + $0xb0] sm:$0xff]
          %v1819 = vld [vmem:[%s1795 + $0xb8] sm:$0xff]
          %v1820 = vadd.f32 %v1796, %v1767
          %v1821 = vadd.f32 %v1797, %v1768
          %v1822 = vadd.f32 %v1798, %v1769
          %v1823 = vadd.f32 %v1799, %v1770
          %v1824 = vadd.f32 %v1800, %v1771
          %v1825 = vadd.f32 %v1801, %v1772
          %v1826 = vadd.f32 %v1802, %v1773
          %v1827 = vadd.f32 %v1803, %v1774
          %v1828 = vadd.f32 %v1804, %v1775
          %v1829 = vadd.f32 %v1805, %v1776
          %v1830 = vadd.f32 %v1806, %v1777
          %v1831 = vadd.f32 %v1807, %v1778
          %v1832 = vadd.f32 %v1808, %v1779
          %v1833 = vadd.f32 %v1809, %v1780
          %v1834 = vadd.f32 %v1810, %v1781
          %v1835 = vadd.f32 %v1811, %v1782
          %v1836 = vadd.f32 %v1812, %v1783
          %v1837 = vadd.f32 %v1813, %v1784
          %v1838 = vadd.f32 %v1814, %v1785
          %v1839 = vadd.f32 %v1815, %v1786
          %v1840 = vadd.f32 %v1816, %v1787
          %v1841 = vadd.f32 %v1817, %v1788
          %v1842 = vadd.f32 %v1818, %v1789
          %v1843 = vadd.f32 %v1819, %v1790
          %1844 = vst [vmem:[%s1795] sm:$0xff] %v1820
          %1845 = vst [vmem:[%s1795 + $0x8] sm:$0xff] %v1821
          %1846 = vst [vmem:[%s1795 + $0x10] sm:$0xff] %v1822
          %1847 = vst [vmem:[%s1795 + $0x18] sm:$0xff] %v1823
          %1848 = vst [vmem:[%s1795 + $0x20] sm:$0xff] %v1824
          %1849 = vst [vmem:[%s1795 + $0x28] sm:$0xff] %v1825
          %1850 = vst [vmem:[%s1795 + $0x30] sm:$0xff] %v1826
          %1851 = vst [vmem:[%s1795 + $0x38] sm:$0xff] %v1827
          %1852 = vst [vmem:[%s1795 + $0x40] sm:$0xff] %v1828
          %1853 = vst [vmem:[%s1795 + $0x48] sm:$0xff] %v1829
          %1854 = vst [vmem:[%s1795 + $0x50] sm:$0xff] %v1830
          %1855 = vst [vmem:[%s1795 + $0x58] sm:$0xff] %v1831
          %1856 = vst [vmem:[%s1795 + $0x60] sm:$0xff] %v1832
          %1857 = vst [vmem:[%s1795 + $0x68] sm:$0xff] %v1833
          %1858 = vst [vmem:[%s1795 + $0x70] sm:$0xff] %v1834
          %1859 = vst [vmem:[%s1795 + $0x78] sm:$0xff] %v1835
          %1860 = vst [vmem:[%s1795 + $0x80] sm:$0xff] %v1836
          %1861 = vst [vmem:[%s1795 + $0x88] sm:$0xff] %v1837
          %1862 = vst [vmem:[%s1795 + $0x90] sm:$0xff] %v1838
          %1863 = vst [vmem:[%s1795 + $0x98] sm:$0xff] %v1839
          %1864 = vst [vmem:[%s1795 + $0xa0] sm:$0xff] %v1840
          %1865 = vst [vmem:[%s1795 + $0xa8] sm:$0xff] %v1841
          %1866 = vst [vmem:[%s1795 + $0xb0] sm:$0xff] %v1842
          %1867 = vst [vmem:[%s1795 + $0xb8] sm:$0xff] %v1843
        $region78: #{conv_transpose2d_silu.1} parent=64 // loop_footer
          %s760 = sadd.s32 1, %s756
        $region79: #{conv_transpose2d_silu.1} parent=64 // loop_footer_branch
          %755 = sbr.rel target = $region75
        $region80: #{conv_transpose2d_silu.1} parent=64 // loop_exit
          _
        %v1868 = vld [vmem:[%s589 + $0xf0] sm:$0xf]
        %v1869 = vld [vmem:[%s589 + $0xf4] sm:$0xf]
        %v1870 = vld [vmem:[%s589 + $0xf8] sm:$0xf]
        %v1871 = vld [vmem:[%s589 + $0xfc] sm:$0xf]
        %v1872 = vld [vmem:[%s589 + $0x100] sm:$0xf]
        %v1873 = vld [vmem:[%s589 + $0x104] sm:$0xf]
        %v1874 = vld [vmem:[%s589 + $0x108] sm:$0xf]
        %v1875 = vld [vmem:[%s589 + $0x10c] sm:$0xf]
        %s1876 = sshra.s32 %s754, 3
        %s1877 = sand.u32 %s754, 7
        %s1878 = smul.u32 %s1876, 2
        %s1879 = smul.addr %s1878, 4
        %s1880 = scalar_lea.vmem %s1, %s1879
        %v1881 = vld [vmem:[%s1880] sm:$0xff]
        %v1882 = vld [vmem:[%s1880 + $0x8] sm:$0xff]
        %v1883 = vld [vmem:[%s1880 + $0x10] sm:$0xff]
        %v1884 = vld [vmem:[%s1880 + $0x18] sm:$0xff]
        %v1885 = vld [vmem:[%s1880 + $0x20] sm:$0xff]
        %v1886 = vld [vmem:[%s1880 + $0x28] sm:$0xff]
        %v1887 = vld [vmem:[%s1880 + $0x30] sm:$0xff]
        %v1888 = vld [vmem:[%s1880 + $0x38] sm:$0xff]
        %v1889 = vld [vmem:[%s1880 + $0x40] sm:$0xff]
        %v1890 = vld [vmem:[%s1880 + $0x48] sm:$0xff]
        %v1891 = vld [vmem:[%s1880 + $0x50] sm:$0xff]
        %v1892 = vld [vmem:[%s1880 + $0x58] sm:$0xff]
        %v1893 = vld [vmem:[%s1880 + $0x60] sm:$0xff]
        %v1894 = vld [vmem:[%s1880 + $0x68] sm:$0xff]
        %v1895 = vld [vmem:[%s1880 + $0x70] sm:$0xff]
        %v1896 = vld [vmem:[%s1880 + $0x78] sm:$0xff]
        %v1897 = vld [vmem:[%s589 + $0x120] sm:$0xf]
        %v1898 = vld [vmem:[%s589 + $0x124] sm:$0xf]
        %v1899 = vld [vmem:[%s589 + $0x128] sm:$0xf]
        %v1900 = vld [vmem:[%s589 + $0x12c] sm:$0xf]
        %v1901 = vld [vmem:[%s589 + $0x130] sm:$0xf]
        %v1902 = vld [vmem:[%s589 + $0x134] sm:$0xf]
        %v1903 = vld [vmem:[%s589 + $0x138] sm:$0xf]
        %v1904 = vld [vmem:[%s589 + $0x13c] sm:$0xf]
        %s1905 = sadd.s32 %s1878, 96
        %s1906 = smul.addr %s1905, 4
        %s1907 = scalar_lea.vmem %s1, %s1906
        %v1908 = vld [vmem:[%s1907] sm:$0xff]
        %v1909 = vld [vmem:[%s1907 + $0x8] sm:$0xff]
        %v1910 = vld [vmem:[%s1907 + $0x10] sm:$0xff]
        %v1911 = vld [vmem:[%s1907 + $0x18] sm:$0xff]
        %v1912 = vld [vmem:[%s1907 + $0x20] sm:$0xff]
        %v1913 = vld [vmem:[%s1907 + $0x28] sm:$0xff]
        %v1914 = vld [vmem:[%s1907 + $0x30] sm:$0xff]
        %v1915 = vld [vmem:[%s1907 + $0x38] sm:$0xff]
        %v1916 = vld [vmem:[%s1907 + $0x40] sm:$0xff]
        %v1917 = vld [vmem:[%s1907 + $0x48] sm:$0xff]
        %v1918 = vld [vmem:[%s1907 + $0x50] sm:$0xff]
        %v1919 = vld [vmem:[%s1907 + $0x58] sm:$0xff]
        %v1920 = vld [vmem:[%s1907 + $0x60] sm:$0xff]
        %v1921 = vld [vmem:[%s1907 + $0x68] sm:$0xff]
        %v1922 = vld [vmem:[%s1907 + $0x70] sm:$0xff]
        %v1923 = vld [vmem:[%s1907 + $0x78] sm:$0xff]
        %v1932 = vunpack.c.l.b16 %v1897
        %v1933 = vunpack.c.l.b16 %v1898
        %v1934 = vunpack.c.l.b16 %v1899
        %v1935 = vunpack.c.l.b16 %v1900
        %v1936 = vunpack.c.l.b16 %v1901
        %v1937 = vunpack.c.l.b16 %v1902
        %v1938 = vunpack.c.l.b16 %v1903
        %v1939 = vunpack.c.l.b16 %v1904
        %v1940 = vpack.c.b16 %v1933, %v1932
        %v1941 = vpack.c.b16 %v1935, %v1934
        %v1942 = vpack.c.b16 %v1937, %v1936
        %v1943 = vpack.c.b16 %v1939, %v1938
        %v1964 = vunpack.c.l.b16 %v1908
        %v1965 = vunpack.c.h.b16 %v1908
        %v1966 = vunpack.c.l.b16 %v1909
        %v1967 = vunpack.c.h.b16 %v1909
        %v1968 = vunpack.c.l.b16 %v1910
        %v1969 = vunpack.c.h.b16 %v1910
        %v1970 = vunpack.c.l.b16 %v1911
        %v1971 = vunpack.c.h.b16 %v1911
        %v1972 = vunpack.c.l.b16 %v1912
        %v1973 = vunpack.c.h.b16 %v1912
        %v1974 = vunpack.c.l.b16 %v1913
        %v1975 = vunpack.c.h.b16 %v1913
        %v1976 = vunpack.c.l.b16 %v1914
        %v1977 = vunpack.c.h.b16 %v1914
        %v1978 = vunpack.c.l.b16 %v1915
        %v1979 = vunpack.c.h.b16 %v1915
        %v1980 = vunpack.c.l.b16 %v1916
        %v1981 = vunpack.c.h.b16 %v1916
        %v1982 = vunpack.c.l.b16 %v1917
        %v1983 = vunpack.c.h.b16 %v1917
        %v1984 = vunpack.c.l.b16 %v1918
        %v1985 = vunpack.c.h.b16 %v1918
        %v1986 = vunpack.c.l.b16 %v1919
        %v1987 = vunpack.c.h.b16 %v1919
        %v1988 = vunpack.c.l.b16 %v1920
        %v1989 = vunpack.c.h.b16 %v1920
        %v1990 = vunpack.c.l.b16 %v1921
        %v1991 = vunpack.c.h.b16 %v1921
        %v1992 = vunpack.c.l.b16 %v1922
        %v1993 = vunpack.c.h.b16 %v1922
        %v1994 = vunpack.c.l.b16 %v1923
        %v1995 = vunpack.c.h.b16 %v1923
        %v1996 = vpack.c.b16 %v1966, %v1964
        %v1997 = vpack.c.b16 %v1967, %v1965
        %v1998 = vpack.c.b16 %v1970, %v1968
        %v1999 = vpack.c.b16 %v1971, %v1969
        %v2000 = vpack.c.b16 %v1974, %v1972
        %v2001 = vpack.c.b16 %v1975, %v1973
        %v2002 = vpack.c.b16 %v1978, %v1976
        %v2003 = vpack.c.b16 %v1979, %v1977
        %v2004 = vpack.c.b16 %v1982, %v1980
        %v2005 = vpack.c.b16 %v1983, %v1981
        %v2006 = vpack.c.b16 %v1986, %v1984
        %v2007 = vpack.c.b16 %v1987, %v1985
        %v2008 = vpack.c.b16 %v1990, %v1988
        %v2009 = vpack.c.b16 %v1991, %v1989
        %v2010 = vpack.c.b16 %v1994, %v1992
        %v2011 = vpack.c.b16 %v1995, %v1993
        %2028 = vmatprep.subr.bf16.mxu0 %v1997
        %2029 = vmatpush1.bf16.msra.mxu0 %v1996
        %2030 = vmatprep.subr.bf16.mxu0 %v1999
        %2031 = vmatpush1.bf16.msra.mxu0 %v1998
        %2032 = vmatprep.subr.bf16.mxu0 %v2001
        %2033 = vmatpush1.bf16.msra.mxu0 %v2000
        %2034 = vmatprep.subr.bf16.mxu0 %v2003
        %2035 = vmatpush1.bf16.msra.mxu0 %v2002
        %2036 = vmatprep.subr.bf16.mxu0 %v2005
        %2037 = vmatpush1.bf16.msra.mxu0 %v2004
        %2038 = vmatprep.subr.bf16.mxu0 %v2007
        %2039 = vmatpush1.bf16.msra.mxu0 %v2006
        %2040 = vmatprep.subr.bf16.mxu0 %v2009
        %2041 = vmatpush1.bf16.msra.mxu0 %v2008
        %2042 = vmatprep.subr.bf16.mxu0 %v2011
        %2043 = vmatpush1.bf16.msra.mxu0 %v2010
        %2044 = vmatprep.subr.bf16.mxu0 0
        %2045 = vmatpush1.bf16.msra.mxu0 0
        %2046 = vmatprep.subr.bf16.mxu0 0
        %2047 = vmatpush1.bf16.msra.mxu0 0
        %2048 = vmatprep.subr.bf16.mxu0 0
        %2049 = vmatpush1.bf16.msra.mxu0 0
        %2050 = vmatprep.subr.bf16.mxu0 0
        %2051 = vmatpush1.bf16.msra.mxu0 0
        %2052 = vmatprep.subr.bf16.mxu0 0
        %2053 = vmatpush1.bf16.msra.mxu0 0
        %2054 = vmatprep.subr.bf16.mxu0 0
        %2055 = vmatpush1.bf16.msra.mxu0 0
        %2056 = vmatprep.subr.bf16.mxu0 0
        %2057 = vmatpush1.bf16.msra.mxu0 0
        %2058 = vmatprep.subr.bf16.mxu0 0
        %2059 = vmatpush1.bf16.msra.mxu0 0
        %2060 = vmatprep.mubr.bf16.mxu0 0
        %2061 = vmatmul.mubr.bf16.gmra.mrb[0].mxu0 %v1940
        %v2062 = vpop.f32.mrb[0].mxu0
        %v2063 = vadd.f32 0.0, %v2062
        %v2064 = vpop.f32.mrb[0].mxu0
        %v2065 = vadd.f32 0.0, %v2064
        %v2066 = vpop.f32.mrb[0].mxu0
        %v2067 = vadd.f32 0.0, %v2066
        %v2068 = vpop.f32.mrb[0].mxu0
        %v2069 = vadd.f32 0.0, %v2068
        %2070 = vmatprep.mubr.bf16.mxu0 0
        %2071 = vmatmul.mubr.bf16.gmra.mrb[0].mxu0 %v1941
        %v2072 = vpop.f32.mrb[0].mxu0
        %v2073 = vadd.f32 0.0, %v2072
        %v2074 = vpop.f32.mrb[0].mxu0
        %v2075 = vadd.f32 0.0, %v2074
        %v2076 = vpop.f32.mrb[0].mxu0
        %v2077 = vadd.f32 0.0, %v2076
        %v2078 = vpop.f32.mrb[0].mxu0
        %v2079 = vadd.f32 0.0, %v2078
        %2080 = vmatprep.mubr.bf16.mxu0 0
        %2081 = vmatmul.mubr.bf16.gmra.mrb[0].mxu0 %v1942
        %v2082 = vpop.f32.mrb[0].mxu0
        %v2083 = vadd.f32 0.0, %v2082
        %v2084 = vpop.f32.mrb[0].mxu0
        %v2085 = vadd.f32 0.0, %v2084
        %v2086 = vpop.f32.mrb[0].mxu0
        %v2087 = vadd.f32 0.0, %v2086
        %v2088 = vpop.f32.mrb[0].mxu0
        %v2089 = vadd.f32 0.0, %v2088
        %2090 = vmatprep.mubr.bf16.mxu0 0
        %2091 = vmatmul.mubr.bf16.gmra.mrb[0].mxu0 %v1943
        %v2092 = vpop.f32.mrb[0].mxu0
        %v2093 = vadd.f32 0.0, %v2092
        %v2094 = vpop.f32.mrb[0].mxu0
        %v2095 = vadd.f32 0.0, %v2094
        %v2096 = vpop.f32.mrb[0].mxu0
        %v2097 = vadd.f32 0.0, %v2096
        %v2098 = vpop.f32.mrb[0].mxu0
        %v2099 = vadd.f32 0.0, %v2098
        %2100 = vdwg.mxu0
        %v2109 = vunpack.c.l.b16 %v1868
        %v2110 = vunpack.c.l.b16 %v1869
        %v2111 = vunpack.c.l.b16 %v1870
        %v2112 = vunpack.c.l.b16 %v1871
        %v2113 = vunpack.c.l.b16 %v1872
        %v2114 = vunpack.c.l.b16 %v1873
        %v2115 = vunpack.c.l.b16 %v1874
        %v2116 = vunpack.c.l.b16 %v1875
        %v2117 = vpack.c.b16 %v2110, %v2109
        %v2118 = vpack.c.b16 %v2112, %v2111
        %v2119 = vpack.c.b16 %v2114, %v2113
        %v2120 = vpack.c.b16 %v2116, %v2115
        %v2141 = vunpack.c.l.b16 %v1881
        %v2142 = vunpack.c.h.b16 %v1881
        %v2143 = vunpack.c.l.b16 %v1882
        %v2144 = vunpack.c.h.b16 %v1882
        %v2145 = vunpack.c.l.b16 %v1883
        %v2146 = vunpack.c.h.b16 %v1883
        %v2147 = vunpack.c.l.b16 %v1884
        %v2148 = vunpack.c.h.b16 %v1884
        %v2149 = vunpack.c.l.b16 %v1885
        %v2150 = vunpack.c.h.b16 %v1885
        %v2151 = vunpack.c.l.b16 %v1886
        %v2152 = vunpack.c.h.b16 %v1886
        %v2153 = vunpack.c.l.b16 %v1887
        %v2154 = vunpack.c.h.b16 %v1887
        %v2155 = vunpack.c.l.b16 %v1888
        %v2156 = vunpack.c.h.b16 %v1888
        %v2157 = vunpack.c.l.b16 %v1889
        %v2158 = vunpack.c.h.b16 %v1889
        %v2159 = vunpack.c.l.b16 %v1890
        %v2160 = vunpack.c.h.b16 %v1890
        %v2161 = vunpack.c.l.b16 %v1891
        %v2162 = vunpack.c.h.b16 %v1891
        %v2163 = vunpack.c.l.b16 %v1892
        %v2164 = vunpack.c.h.b16 %v1892
        %v2165 = vunpack.c.l.b16 %v1893
        %v2166 = vunpack.c.h.b16 %v1893
        %v2167 = vunpack.c.l.b16 %v1894
        %v2168 = vunpack.c.h.b16 %v1894
        %v2169 = vunpack.c.l.b16 %v1895
        %v2170 = vunpack.c.h.b16 %v1895
        %v2171 = vunpack.c.l.b16 %v1896
        %v2172 = vunpack.c.h.b16 %v1896
        %v2173 = vpack.c.b16 %v2143, %v2141
        %v2174 = vpack.c.b16 %v2144, %v2142
        %v2175 = vpack.c.b16 %v2147, %v2145
        %v2176 = vpack.c.b16 %v2148, %v2146
        %v2177 = vpack.c.b16 %v2151, %v2149
        %v2178 = vpack.c.b16 %v2152, %v2150
        %v2179 = vpack.c.b16 %v2155, %v2153
        %v2180 = vpack.c.b16 %v2156, %v2154
        %v2181 = vpack.c.b16 %v2159, %v2157
        %v2182 = vpack.c.b16 %v2160, %v2158
        %v2183 = vpack.c.b16 %v2163, %v2161
        %v2184 = vpack.c.b16 %v2164, %v2162
        %v2185 = vpack.c.b16 %v2167, %v2165
        %v2186 = vpack.c.b16 %v2168, %v2166
        %v2187 = vpack.c.b16 %v2171, %v2169
        %v2188 = vpack.c.b16 %v2172, %v2170
        %2205 = vmatprep.subr.bf16.mxu0 %v2174
        %2206 = vmatpush1.bf16.msra.mxu0 %v2173
        %2207 = vmatprep.subr.bf16.mxu0 %v2176
        %2208 = vmatpush1.bf16.msra.mxu0 %v2175
        %2209 = vmatprep.subr.bf16.mxu0 %v2178
        %2210 = vmatpush1.bf16.msra.mxu0 %v2177
        %2211 = vmatprep.subr.bf16.mxu0 %v2180
        %2212 = vmatpush1.bf16.msra.mxu0 %v2179
        %2213 = vmatprep.subr.bf16.mxu0 %v2182
        %2214 = vmatpush1.bf16.msra.mxu0 %v2181
        %2215 = vmatprep.subr.bf16.mxu0 %v2184
        %2216 = vmatpush1.bf16.msra.mxu0 %v2183
        %2217 = vmatprep.subr.bf16.mxu0 %v2186
        %2218 = vmatpush1.bf16.msra.mxu0 %v2185
        %2219 = vmatprep.subr.bf16.mxu0 %v2188
        %2220 = vmatpush1.bf16.msra.mxu0 %v2187
        %2221 = vmatprep.subr.bf16.mxu0 0
        %2222 = vmatpush1.bf16.msra.mxu0 0
        %2223 = vmatprep.subr.bf16.mxu0 0
        %2224 = vmatpush1.bf16.msra.mxu0 0
        %2225 = vmatprep.subr.bf16.mxu0 0
        %2226 = vmatpush1.bf16.msra.mxu0 0
        %2227 = vmatprep.subr.bf16.mxu0 0
        %2228 = vmatpush1.bf16.msra.mxu0 0
        %2229 = vmatprep.subr.bf16.mxu0 0
        %2230 = vmatpush1.bf16.msra.mxu0 0
        %2231 = vmatprep.subr.bf16.mxu0 0
        %2232 = vmatpush1.bf16.msra.mxu0 0
        %2233 = vmatprep.subr.bf16.mxu0 0
        %2234 = vmatpush1.bf16.msra.mxu0 0
        %2235 = vmatprep.subr.bf16.mxu0 0
        %2236 = vmatpush1.bf16.msra.mxu0 0
        %2237 = vmatprep.mubr.bf16.mxu0 0
        %2238 = vmatmul.mubr.bf16.gmra.mrb[0].mxu0 %v2117
        %v2239 = vpop.f32.mrb[0].mxu0
        %v2240 = vadd.f32 %v2063, %v2239
        %v2241 = vpop.f32.mrb[0].mxu0
        %v2242 = vadd.f32 %v2065, %v2241
        %v2243 = vpop.f32.mrb[0].mxu0
        %v2244 = vadd.f32 %v2067, %v2243
        %v2245 = vpop.f32.mrb[0].mxu0
        %v2246 = vadd.f32 %v2069, %v2245
        %2247 = vmatprep.mubr.bf16.mxu0 0
        %2248 = vmatmul.mubr.bf16.gmra.mrb[0].mxu0 %v2118
        %v2249 = vpop.f32.mrb[0].mxu0
        %v2250 = vadd.f32 %v2073, %v2249
        %v2251 = vpop.f32.mrb[0].mxu0
        %v2252 = vadd.f32 %v2075, %v2251
        %v2253 = vpop.f32.mrb[0].mxu0
        %v2254 = vadd.f32 %v2077, %v2253
        %v2255 = vpop.f32.mrb[0].mxu0
        %v2256 = vadd.f32 %v2079, %v2255
        %2257 = vmatprep.mubr.bf16.mxu0 0
        %2258 = vmatmul.mubr.bf16.gmra.mrb[0].mxu0 %v2119
        %v2259 = vpop.f32.mrb[0].mxu0
        %v2260 = vadd.f32 %v2083, %v2259
        %v2261 = vpop.f32.mrb[0].mxu0
        %v2262 = vadd.f32 %v2085, %v2261
        %v2263 = vpop.f32.mrb[0].mxu0
        %v2264 = vadd.f32 %v2087, %v2263
        %v2265 = vpop.f32.mrb[0].mxu0
        %v2266 = vadd.f32 %v2089, %v2265
        %2267 = vmatprep.mubr.bf16.mxu0 0
        %2268 = vmatmul.mubr.bf16.gmra.mrb[0].mxu0 %v2120
        %v2269 = vpop.f32.mrb[0].mxu0
        %v2270 = vadd.f32 %v2093, %v2269
        %v2271 = vpop.f32.mrb[0].mxu0
        %v2272 = vadd.f32 %v2095, %v2271
        %v2273 = vpop.f32.mrb[0].mxu0
        %v2274 = vadd.f32 %v2097, %v2273
        %v2275 = vpop.f32.mrb[0].mxu0
        %v2276 = vadd.f32 %v2099, %v2275
        %2277 = vdwg.mxu0
        %v2278 = vld [vmem:[%s589 + $0x150] sm:$0xf]
        %v2279 = vld [vmem:[%s589 + $0x154] sm:$0xf]
        %v2280 = vld [vmem:[%s589 + $0x158] sm:$0xf]
        %v2281 = vld [vmem:[%s589 + $0x15c] sm:$0xf]
        %v2282 = vld [vmem:[%s589 + $0x160] sm:$0xf]
        %v2283 = vld [vmem:[%s589 + $0x164] sm:$0xf]
        %v2284 = vld [vmem:[%s589 + $0x168] sm:$0xf]
        %v2285 = vld [vmem:[%s589 + $0x16c] sm:$0xf]
        %s2286 = sadd.s32 %s1878, 192
        %s2287 = smul.addr %s2286, 4
        %s2288 = scalar_lea.vmem %s1, %s2287
        %v2289 = vld [vmem:[%s2288] sm:$0xff]
        %v2290 = vld [vmem:[%s2288 + $0x8] sm:$0xff]
        %v2291 = vld [vmem:[%s2288 + $0x10] sm:$0xff]
        %v2292 = vld [vmem:[%s2288 + $0x18] sm:$0xff]
        %v2293 = vld [vmem:[%s2288 + $0x20] sm:$0xff]
        %v2294 = vld [vmem:[%s2288 + $0x28] sm:$0xff]
        %v2295 = vld [vmem:[%s2288 + $0x30] sm:$0xff]
        %v2296 = vld [vmem:[%s2288 + $0x38] sm:$0xff]
        %v2297 = vld [vmem:[%s2288 + $0x40] sm:$0xff]
        %v2298 = vld [vmem:[%s2288 + $0x48] sm:$0xff]
        %v2299 = vld [vmem:[%s2288 + $0x50] sm:$0xff]
        %v2300 = vld [vmem:[%s2288 + $0x58] sm:$0xff]
        %v2301 = vld [vmem:[%s2288 + $0x60] sm:$0xff]
        %v2302 = vld [vmem:[%s2288 + $0x68] sm:$0xff]
        %v2303 = vld [vmem:[%s2288 + $0x70] sm:$0xff]
        %v2304 = vld [vmem:[%s2288 + $0x78] sm:$0xff]
        %v2313 = vunpack.c.l.b16 %v2278
        %v2314 = vunpack.c.l.b16 %v2279
        %v2315 = vunpack.c.l.b16 %v2280
        %v2316 = vunpack.c.l.b16 %v2281
        %v2317 = vunpack.c.l.b16 %v2282
        %v2318 = vunpack.c.l.b16 %v2283
        %v2319 = vunpack.c.l.b16 %v2284
        %v2320 = vunpack.c.l.b16 %v2285
        %v2321 = vpack.c.b16 %v2314, %v2313
        %v2322 = vpack.c.b16 %v2316, %v2315
        %v2323 = vpack.c.b16 %v2318, %v2317
        %v2324 = vpack.c.b16 %v2320, %v2319
        %v2345 = vunpack.c.l.b16 %v2289
        %v2346 = vunpack.c.h.b16 %v2289
        %v2347 = vunpack.c.l.b16 %v2290
        %v2348 = vunpack.c.h.b16 %v2290
        %v2349 = vunpack.c.l.b16 %v2291
        %v2350 = vunpack.c.h.b16 %v2291
        %v2351 = vunpack.c.l.b16 %v2292
        %v2352 = vunpack.c.h.b16 %v2292
        %v2353 = vunpack.c.l.b16 %v2293
        %v2354 = vunpack.c.h.b16 %v2293
        %v2355 = vunpack.c.l.b16 %v2294
        %v2356 = vunpack.c.h.b16 %v2294
        %v2357 = vunpack.c.l.b16 %v2295
        %v2358 = vunpack.c.h.b16 %v2295
        %v2359 = vunpack.c.l.b16 %v2296
        %v2360 = vunpack.c.h.b16 %v2296
        %v2361 = vunpack.c.l.b16 %v2297
        %v2362 = vunpack.c.h.b16 %v2297
        %v2363 = vunpack.c.l.b16 %v2298
        %v2364 = vunpack.c.h.b16 %v2298
        %v2365 = vunpack.c.l.b16 %v2299
        %v2366 = vunpack.c.h.b16 %v2299
        %v2367 = vunpack.c.l.b16 %v2300
        %v2368 = vunpack.c.h.b16 %v2300
        %v2369 = vunpack.c.l.b16 %v2301
        %v2370 = vunpack.c.h.b16 %v2301
        %v2371 = vunpack.c.l.b16 %v2302
        %v2372 = vunpack.c.h.b16 %v2302
        %v2373 = vunpack.c.l.b16 %v2303
        %v2374 = vunpack.c.h.b16 %v2303
        %v2375 = vunpack.c.l.b16 %v2304
        %v2376 = vunpack.c.h.b16 %v2304
        %v2377 = vpack.c.b16 %v2347, %v2345
        %v2378 = vpack.c.b16 %v2348, %v2346
        %v2379 = vpack.c.b16 %v2351, %v2349
        %v2380 = vpack.c.b16 %v2352, %v2350
        %v2381 = vpack.c.b16 %v2355, %v2353
        %v2382 = vpack.c.b16 %v2356, %v2354
        %v2383 = vpack.c.b16 %v2359, %v2357
        %v2384 = vpack.c.b16 %v2360, %v2358
        %v2385 = vpack.c.b16 %v2363, %v2361
        %v2386 = vpack.c.b16 %v2364, %v2362
        %v2387 = vpack.c.b16 %v2367, %v2365
        %v2388 = vpack.c.b16 %v2368, %v2366
        %v2389 = vpack.c.b16 %v2371, %v2369
        %v2390 = vpack.c.b16 %v2372, %v2370
        %v2391 = vpack.c.b16 %v2375, %v2373
        %v2392 = vpack.c.b16 %v2376, %v2374
        %2409 = vmatprep.subr.bf16.mxu0 %v2378
        %2410 = vmatpush1.bf16.msra.mxu0 %v2377
        %2411 = vmatprep.subr.bf16.mxu0 %v2380
        %2412 = vmatpush1.bf16.msra.mxu0 %v2379
        %2413 = vmatprep.subr.bf16.mxu0 %v2382
        %2414 = vmatpush1.bf16.msra.mxu0 %v2381
        %2415 = vmatprep.subr.bf16.mxu0 %v2384
        %2416 = vmatpush1.bf16.msra.mxu0 %v2383
        %2417 = vmatprep.subr.bf16.mxu0 %v2386
        %2418 = vmatpush1.bf16.msra.mxu0 %v2385
        %2419 = vmatprep.subr.bf16.mxu0 %v2388
        %2420 = vmatpush1.bf16.msra.mxu0 %v2387
        %2421 = vmatprep.subr.bf16.mxu0 %v2390
        %2422 = vmatpush1.bf16.msra.mxu0 %v2389
        %2423 = vmatprep.subr.bf16.mxu0 %v2392
        %2424 = vmatpush1.bf16.msra.mxu0 %v2391
        %2425 = vmatprep.subr.bf16.mxu0 0
        %2426 = vmatpush1.bf16.msra.mxu0 0
        %2427 = vmatprep.subr.bf16.mxu0 0
        %2428 = vmatpush1.bf16.msra.mxu0 0
        %2429 = vmatprep.subr.bf16.mxu0 0
        %2430 = vmatpush1.bf16.msra.mxu0 0
        %2431 = vmatprep.subr.bf16.mxu0 0
        %2432 = vmatpush1.bf16.msra.mxu0 0
        %2433 = vmatprep.subr.bf16.mxu0 0
        %2434 = vmatpush1.bf16.msra.mxu0 0
        %2435 = vmatprep.subr.bf16.mxu0 0
        %2436 = vmatpush1.bf16.msra.mxu0 0
        %2437 = vmatprep.subr.bf16.mxu0 0
        %2438 = vmatpush1.bf16.msra.mxu0 0
        %2439 = vmatprep.subr.bf16.mxu0 0
        %2440 = vmatpush1.bf16.msra.mxu0 0
        %2441 = vmatprep.mubr.bf16.mxu0 0
        %2442 = vmatmul.mubr.bf16.gmra.mrb[0].mxu0 %v2321
        %v2443 = vpop.f32.mrb[0].mxu0
        %v2444 = vadd.f32 0.0, %v2443
        %v2445 = vpop.f32.mrb[0].mxu0
        %v2446 = vadd.f32 0.0, %v2445
        %v2447 = vpop.f32.mrb[0].mxu0
        %v2448 = vadd.f32 0.0, %v2447
        %v2449 = vpop.f32.mrb[0].mxu0
        %v2450 = vadd.f32 0.0, %v2449
        %2451 = vmatprep.mubr.bf16.mxu0 0
        %2452 = vmatmul.mubr.bf16.gmra.mrb[0].mxu0 %v2322
        %v2453 = vpop.f32.mrb[0].mxu0
        %v2454 = vadd.f32 0.0, %v2453
        %v2455 = vpop.f32.mrb[0].mxu0
        %v2456 = vadd.f32 0.0, %v2455
        %v2457 = vpop.f32.mrb[0].mxu0
        %v2458 = vadd.f32 0.0, %v2457
        %v2459 = vpop.f32.mrb[0].mxu0
        %v2460 = vadd.f32 0.0, %v2459
        %2461 = vmatprep.mubr.bf16.mxu0 0
        %2462 = vmatmul.mubr.bf16.gmra.mrb[0].mxu0 %v2323
        %v2463 = vpop.f32.mrb[0].mxu0
        %v2464 = vadd.f32 0.0, %v2463
        %v2465 = vpop.f32.mrb[0].mxu0
        %v2466 = vadd.f32 0.0, %v2465
        %v2467 = vpop.f32.mrb[0].mxu0
        %v2468 = vadd.f32 0.0, %v2467
        %v2469 = vpop.f32.mrb[0].mxu0
        %v2470 = vadd.f32 0.0, %v2469
        %2471 = vmatprep.mubr.bf16.mxu0 0
        %2472 = vmatmul.mubr.bf16.gmra.mrb[0].mxu0 %v2324
        %v2473 = vpop.f32.mrb[0].mxu0
        %v2474 = vadd.f32 0.0, %v2473
        %v2475 = vpop.f32.mrb[0].mxu0
        %v2476 = vadd.f32 0.0, %v2475
        %v2477 = vpop.f32.mrb[0].mxu0
        %v2478 = vadd.f32 0.0, %v2477
        %v2479 = vpop.f32.mrb[0].mxu0
        %v2480 = vadd.f32 0.0, %v2479
        %2481 = vdwg.mxu0
        %v2482 = vadd.f32 %v2240, %v2444
        %v2483 = vadd.f32 %v2242, %v2446
        %v2484 = vadd.f32 %v2244, %v2448
        %v2485 = vadd.f32 %v2246, %v2450
        %v2486 = vadd.f32 %v2250, %v2454
        %v2487 = vadd.f32 %v2252, %v2456
        %v2488 = vadd.f32 %v2254, %v2458
        %v2489 = vadd.f32 %v2256, %v2460
        %v2490 = vadd.f32 %v2260, %v2464
        %v2491 = vadd.f32 %v2262, %v2466
        %v2492 = vadd.f32 %v2264, %v2468
        %v2493 = vadd.f32 %v2266, %v2470
        %v2494 = vadd.f32 %v2270, %v2474
        %v2495 = vadd.f32 %v2272, %v2476
        %v2496 = vadd.f32 %v2274, %v2478
        %v2497 = vadd.f32 %v2276, %v2480
        %v2498 = vld [vmem:[%s589 + $0x180] sm:$0xf]
        %v2499 = vld [vmem:[%s589 + $0x184] sm:$0xf]
        %v2500 = vld [vmem:[%s589 + $0x188] sm:$0xf]
        %v2501 = vld [vmem:[%s589 + $0x18c] sm:$0xf]
        %v2502 = vld [vmem:[%s589 + $0x190] sm:$0xf]
        %v2503 = vld [vmem:[%s589 + $0x194] sm:$0xf]
        %v2504 = vld [vmem:[%s589 + $0x198] sm:$0xf]
        %v2505 = vld [vmem:[%s589 + $0x19c] sm:$0xf]
        %s2506 = sadd.s32 %s1878, 288
        %s2507 = smul.addr %s2506, 4
        %s2508 = scalar_lea.vmem %s1, %s2507
        %v2509 = vld [vmem:[%s2508] sm:$0xff]
        %v2510 = vld [vmem:[%s2508 + $0x8] sm:$0xff]
        %v2511 = vld [vmem:[%s2508 + $0x10] sm:$0xff]
        %v2512 = vld [vmem:[%s2508 + $0x18] sm:$0xff]
        %v2513 = vld [vmem:[%s2508 + $0x20] sm:$0xff]
        %v2514 = vld [vmem:[%s2508 + $0x28] sm:$0xff]
        %v2515 = vld [vmem:[%s2508 + $0x30] sm:$0xff]
        %v2516 = vld [vmem:[%s2508 + $0x38] sm:$0xff]
        %v2517 = vld [vmem:[%s2508 + $0x40] sm:$0xff]
        %v2518 = vld [vmem:[%s2508 + $0x48] sm:$0xff]
        %v2519 = vld [vmem:[%s2508 + $0x50] sm:$0xff]
        %v2520 = vld [vmem:[%s2508 + $0x58] sm:$0xff]
        %v2521 = vld [vmem:[%s2508 + $0x60] sm:$0xff]
        %v2522 = vld [vmem:[%s2508 + $0x68] sm:$0xff]
        %v2523 = vld [vmem:[%s2508 + $0x70] sm:$0xff]
        %v2524 = vld [vmem:[%s2508 + $0x78] sm:$0xff]
        %v2533 = vunpack.c.l.b16 %v2498
        %v2534 = vunpack.c.l.b16 %v2499
        %v2535 = vunpack.c.l.b16 %v2500
        %v2536 = vunpack.c.l.b16 %v2501
        %v2537 = vunpack.c.l.b16 %v2502
        %v2538 = vunpack.c.l.b16 %v2503
        %v2539 = vunpack.c.l.b16 %v2504
        %v2540 = vunpack.c.l.b16 %v2505
        %v2541 = vpack.c.b16 %v2534, %v2533
        %v2542 = vpack.c.b16 %v2536, %v2535
        %v2543 = vpack.c.b16 %v2538, %v2537
        %v2544 = vpack.c.b16 %v2540, %v2539
        %v2565 = vunpack.c.l.b16 %v2509
        %v2566 = vunpack.c.h.b16 %v2509
        %v2567 = vunpack.c.l.b16 %v2510
        %v2568 = vunpack.c.h.b16 %v2510
        %v2569 = vunpack.c.l.b16 %v2511
        %v2570 = vunpack.c.h.b16 %v2511
        %v2571 = vunpack.c.l.b16 %v2512
        %v2572 = vunpack.c.h.b16 %v2512
        %v2573 = vunpack.c.l.b16 %v2513
        %v2574 = vunpack.c.h.b16 %v2513
        %v2575 = vunpack.c.l.b16 %v2514
        %v2576 = vunpack.c.h.b16 %v2514
        %v2577 = vunpack.c.l.b16 %v2515
        %v2578 = vunpack.c.h.b16 %v2515
        %v2579 = vunpack.c.l.b16 %v2516
        %v2580 = vunpack.c.h.b16 %v2516
        %v2581 = vunpack.c.l.b16 %v2517
        %v2582 = vunpack.c.h.b16 %v2517
        %v2583 = vunpack.c.l.b16 %v2518
        %v2584 = vunpack.c.h.b16 %v2518
        %v2585 = vunpack.c.l.b16 %v2519
        %v2586 = vunpack.c.h.b16 %v2519
        %v2587 = vunpack.c.l.b16 %v2520
        %v2588 = vunpack.c.h.b16 %v2520
        %v2589 = vunpack.c.l.b16 %v2521
        %v2590 = vunpack.c.h.b16 %v2521
        %v2591 = vunpack.c.l.b16 %v2522
        %v2592 = vunpack.c.h.b16 %v2522
        %v2593 = vunpack.c.l.b16 %v2523
        %v2594 = vunpack.c.h.b16 %v2523
        %v2595 = vunpack.c.l.b16 %v2524
        %v2596 = vunpack.c.h.b16 %v2524
        %v2597 = vpack.c.b16 %v2567, %v2565
        %v2598 = vpack.c.b16 %v2568, %v2566
        %v2599 = vpack.c.b16 %v2571, %v2569
        %v2600 = vpack.c.b16 %v2572, %v2570
        %v2601 = vpack.c.b16 %v2575, %v2573
        %v2602 = vpack.c.b16 %v2576, %v2574
        %v2603 = vpack.c.b16 %v2579, %v2577
        %v2604 = vpack.c.b16 %v2580, %v2578
        %v2605 = vpack.c.b16 %v2583, %v2581
        %v2606 = vpack.c.b16 %v2584, %v2582
        %v2607 = vpack.c.b16 %v2587, %v2585
        %v2608 = vpack.c.b16 %v2588, %v2586
        %v2609 = vpack.c.b16 %v2591, %v2589
        %v2610 = vpack.c.b16 %v2592, %v2590
        %v2611 = vpack.c.b16 %v2595, %v2593
        %v2612 = vpack.c.b16 %v2596, %v2594
        %2629 = vmatprep.subr.bf16.mxu0 %v2598
        %2630 = vmatpush1.bf16.msra.mxu0 %v2597
        %2631 = vmatprep.subr.bf16.mxu0 %v2600
        %2632 = vmatpush1.bf16.msra.mxu0 %v2599
        %2633 = vmatprep.subr.bf16.mxu0 %v2602
        %2634 = vmatpush1.bf16.msra.mxu0 %v2601
        %2635 = vmatprep.subr.bf16.mxu0 %v2604
        %2636 = vmatpush1.bf16.msra.mxu0 %v2603
        %2637 = vmatprep.subr.bf16.mxu0 %v2606
        %2638 = vmatpush1.bf16.msra.mxu0 %v2605
        %2639 = vmatprep.subr.bf16.mxu0 %v2608
        %2640 = vmatpush1.bf16.msra.mxu0 %v2607
        %2641 = vmatprep.subr.bf16.mxu0 %v2610
        %2642 = vmatpush1.bf16.msra.mxu0 %v2609
        %2643 = vmatprep.subr.bf16.mxu0 %v2612
        %2644 = vmatpush1.bf16.msra.mxu0 %v2611
        %2645 = vmatprep.subr.bf16.mxu0 0
        %2646 = vmatpush1.bf16.msra.mxu0 0
        %2647 = vmatprep.subr.bf16.mxu0 0
        %2648 = vmatpush1.bf16.msra.mxu0 0
        %2649 = vmatprep.subr.bf16.mxu0 0
        %2650 = vmatpush1.bf16.msra.mxu0 0
        %2651 = vmatprep.subr.bf16.mxu0 0
        %2652 = vmatpush1.bf16.msra.mxu0 0
        %2653 = vmatprep.subr.bf16.mxu0 0
        %2654 = vmatpush1.bf16.msra.mxu0 0
        %2655 = vmatprep.subr.bf16.mxu0 0
        %2656 = vmatpush1.bf16.msra.mxu0 0
        %2657 = vmatprep.subr.bf16.mxu0 0
        %2658 = vmatpush1.bf16.msra.mxu0 0
        %2659 = vmatprep.subr.bf16.mxu0 0
        %2660 = vmatpush1.bf16.msra.mxu0 0
        %2661 = vmatprep.mubr.bf16.mxu0 0
        %2662 = vmatmul.mubr.bf16.gmra.mrb[0].mxu0 %v2541
        %v2663 = vpop.f32.mrb[0].mxu0
        %v2664 = vadd.f32 0.0, %v2663
        %v2665 = vpop.f32.mrb[0].mxu0
        %v2666 = vadd.f32 0.0, %v2665
        %v2667 = vpop.f32.mrb[0].mxu0
        %v2668 = vadd.f32 0.0, %v2667
        %v2669 = vpop.f32.mrb[0].mxu0
        %v2670 = vadd.f32 0.0, %v2669
        %2671 = vmatprep.mubr.bf16.mxu0 0
        %2672 = vmatmul.mubr.bf16.gmra.mrb[0].mxu0 %v2542
        %v2673 = vpop.f32.mrb[0].mxu0
        %v2674 = vadd.f32 0.0, %v2673
        %v2675 = vpop.f32.mrb[0].mxu0
        %v2676 = vadd.f32 0.0, %v2675
        %v2677 = vpop.f32.mrb[0].mxu0
        %v2678 = vadd.f32 0.0, %v2677
        %v2679 = vpop.f32.mrb[0].mxu0
        %v2680 = vadd.f32 0.0, %v2679
        %2681 = vmatprep.mubr.bf16.mxu0 0
        %2682 = vmatmul.mubr.bf16.gmra.mrb[0].mxu0 %v2543
        %v2683 = vpop.f32.mrb[0].mxu0
        %v2684 = vadd.f32 0.0, %v2683
        %v2685 = vpop.f32.mrb[0].mxu0
        %v2686 = vadd.f32 0.0, %v2685
        %v2687 = vpop.f32.mrb[0].mxu0
        %v2688 = vadd.f32 0.0, %v2687
        %v2689 = vpop.f32.mrb[0].mxu0
        %v2690 = vadd.f32 0.0, %v2689
        %2691 = vmatprep.mubr.bf16.mxu0 0
        %2692 = vmatmul.mubr.bf16.gmra.mrb[0].mxu0 %v2544
        %v2693 = vpop.f32.mrb[0].mxu0
        %v2694 = vadd.f32 0.0, %v2693
        %v2695 = vpop.f32.mrb[0].mxu0
        %v2696 = vadd.f32 0.0, %v2695
        %v2697 = vpop.f32.mrb[0].mxu0
        %v2698 = vadd.f32 0.0, %v2697
        %v2699 = vpop.f32.mrb[0].mxu0
        %v2700 = vadd.f32 0.0, %v2699
        %2701 = vdwg.mxu0
        %v2702 = vadd.f32 %v2482, %v2664
        %v2703 = vadd.f32 %v2483, %v2666
        %v2704 = vadd.f32 %v2484, %v2668
        %v2705 = vadd.f32 %v2485, %v2670
        %v2706 = vadd.f32 %v2486, %v2674
        %v2707 = vadd.f32 %v2487, %v2676
        %v2708 = vadd.f32 %v2488, %v2678
        %v2709 = vadd.f32 %v2489, %v2680
        %v2710 = vadd.f32 %v2490, %v2684
        %v2711 = vadd.f32 %v2491, %v2686
        %v2712 = vadd.f32 %v2492, %v2688
        %v2713 = vadd.f32 %v2493, %v2690
        %v2714 = vadd.f32 %v2494, %v2694
        %v2715 = vadd.f32 %v2495, %v2696
        %v2716 = vadd.f32 %v2496, %v2698
        %v2717 = vadd.f32 %v2497, %v2700
        %v2718 = vld [vmem:[%s612 + $0x3c0] sm:$0xff]
        %v2719 = vld [vmem:[%s612 + $0x3c8] sm:$0xff]
        %v2720 = vld [vmem:[%s612 + $0x3d0] sm:$0xff]
        %v2721 = vld [vmem:[%s612 + $0x3d8] sm:$0xff]
        %v2722 = vld [vmem:[%s612 + $0x3e0] sm:$0xff]
        %v2723 = vld [vmem:[%s612 + $0x3e8] sm:$0xff]
        %v2724 = vld [vmem:[%s612 + $0x3f0] sm:$0xff]
        %v2725 = vld [vmem:[%s612 + $0x3f8] sm:$0xff]
        %v2726 = vld [vmem:[%s612 + $0x400] sm:$0xff]
        %v2727 = vld [vmem:[%s612 + $0x408] sm:$0xff]
        %v2728 = vld [vmem:[%s612 + $0x410] sm:$0xff]
        %v2729 = vld [vmem:[%s612 + $0x418] sm:$0xff]
        %v2730 = vld [vmem:[%s612 + $0x420] sm:$0xff]
        %v2731 = vld [vmem:[%s612 + $0x428] sm:$0xff]
        %v2732 = vld [vmem:[%s612 + $0x430] sm:$0xff]
        %v2733 = vld [vmem:[%s612 + $0x438] sm:$0xff]
        %v2734 = vadd.f32 %v2718, %v2702
        %v2735 = vadd.f32 %v2719, %v2703
        %v2736 = vadd.f32 %v2720, %v2704
        %v2737 = vadd.f32 %v2721, %v2705
        %v2738 = vadd.f32 %v2722, %v2706
        %v2739 = vadd.f32 %v2723, %v2707
        %v2740 = vadd.f32 %v2724, %v2708
        %v2741 = vadd.f32 %v2725, %v2709
        %v2742 = vadd.f32 %v2726, %v2710
        %v2743 = vadd.f32 %v2727, %v2711
        %v2744 = vadd.f32 %v2728, %v2712
        %v2745 = vadd.f32 %v2729, %v2713
        %v2746 = vadd.f32 %v2730, %v2714
        %v2747 = vadd.f32 %v2731, %v2715
        %v2748 = vadd.f32 %v2732, %v2716
        %v2749 = vadd.f32 %v2733, %v2717
        %2750 = vst [vmem:[%s612 + $0x3c0] sm:$0xff] %v2734
        %2751 = vst [vmem:[%s612 + $0x3c8] sm:$0xff] %v2735
        %2752 = vst [vmem:[%s612 + $0x3d0] sm:$0xff] %v2736
        %2753 = vst [vmem:[%s612 + $0x3d8] sm:$0xff] %v2737
        %2754 = vst [vmem:[%s612 + $0x3e0] sm:$0xff] %v2738
        %2755 = vst [vmem:[%s612 + $0x3e8] sm:$0xff] %v2739
        %2756 = vst [vmem:[%s612 + $0x3f0] sm:$0xff] %v2740
        %2757 = vst [vmem:[%s612 + $0x3f8] sm:$0xff] %v2741
        %2758 = vst [vmem:[%s612 + $0x400] sm:$0xff] %v2742
        %2759 = vst [vmem:[%s612 + $0x408] sm:$0xff] %v2743
        %2760 = vst [vmem:[%s612 + $0x410] sm:$0xff] %v2744
        %2761 = vst [vmem:[%s612 + $0x418] sm:$0xff] %v2745
        %2762 = vst [vmem:[%s612 + $0x420] sm:$0xff] %v2746
        %2763 = vst [vmem:[%s612 + $0x428] sm:$0xff] %v2747
        %2764 = vst [vmem:[%s612 + $0x430] sm:$0xff] %v2748
        %2765 = vst [vmem:[%s612 + $0x438] sm:$0xff] %v2749
        %p2766 = scmp.lt.s32.totalorder %s17, 1
        %s2767 = scalar_select %p2766, %s17, 1
        %s2768 = smul.addr %s2767, 136
        %s2769 = smul.addr %s2768, 8
        %s2770 = scalar_lea.vmem %s2, %s2769
        // Predicated region
        $region81: #{conv_transpose2d_silu.1} parent=64 // pred_check
          %p2771 = pneg %p92
        $region82: #{conv_transpose2d_silu.1} parent=64 // pred_check_branch
          %2773 = sbr.rel (%p2771) target = $region84
        $region83: #{conv_transpose2d_silu.1} parent=64 // pred_region
          _
        $region84: #{conv_transpose2d_silu.1} parent=64 // pred_fallthru
          _
      $region65: #{conv_transpose2d_silu.1} parent=5 // pred_fallthru
        _
      %p2774 = scmp.le.s32.totalorder 2, %s8
      // Predicated region
      $region85: #{conv_transpose2d_silu.1} parent=5 // pred_check
        %p2775 = pneg %p2774
      $region86: #{conv_transpose2d_silu.1} parent=5 // pred_check_branch
        %2777 = sbr.rel (%p2775) target = $region88
      $region87: #{conv_transpose2d_silu.1} parent=5 // pred_region
        %s2778 = ssub.s32 %s8, 2
        // Predicated region
        $region89: #{conv_transpose2d_silu.1} parent=87 // pred_check
          %p2779 = pneg %p98
        $region90: #{conv_transpose2d_silu.1} parent=87 // pred_check_branch
          %2781 = sbr.rel (%p2779) target = $region92
        $region91: #{conv_transpose2d_silu.1} parent=87 // pred_region
          %p2782 = scmp.lt.s32.totalorder %s19, 1
          %s2783 = scalar_select %p2782, %s19, 1
          %s2784 = smul.addr %s2783, 136
          %s2785 = smul.addr %s2784, 8
          %s2786 = scalar_lea.vmem %s2, %s2785
        $region92: #{conv_transpose2d_silu.1} parent=87 // pred_fallthru
          _
      $region88: #{conv_transpose2d_silu.1} parent=5 // pred_fallthru
        _
    $region6: #{conv_transpose2d_silu.1} parent=1 // loop_footer
      %s12 = sadd.s32 1, %s8
    $region7: #{conv_transpose2d_silu.1} parent=1 // loop_footer_branch
      %7 = sbr.rel target = $region3
    $region8: #{conv_transpose2d_silu.1} parent=1 // loop_exit
      _

</llo_original>
